<compile_context>
chip_gen: v6e
topology: v6e:2x2x1
jax: 0.10.0
libtpu: 0.0.40
codegen_flags: <defaults>
</compile_context>

<pallas_src>
import jax
import jax.numpy as jnp
from jax.experimental import pallas as pl
from jax.experimental.pallas import tpu as pltpu

IN_FEATURES = 28 * 28   # 784 (kept unpadded; block dim == full array dim is legal)
HIDDEN = 512
OUT_FEATURES = 10
N_PAD = 128             # 10 padded up to one full lane tile for a dense vst


def mlp_kernel(x_ref, w1_ref, b1_ref, w2_ref, b2_ref, w3_ref, b3_ref, out_ref):
    # Input arrives as f32; cast to bf16 in-vreg (VPU) right before the MXU pass.
    x = x_ref[...].astype(jnp.bfloat16)
    # Layer 1: (bt, 784) @ (784, 512) -> f32 accumulate, + bias, ReLU, cast bf16
    h1 = jnp.dot(x, w1_ref[...], preferred_element_type=jnp.float32)
    h1 = jnp.maximum(h1 + b1_ref[...], 0.0).astype(jnp.bfloat16)
    # Layer 2: (bt, 512) @ (512, 512)
    h2 = jnp.dot(h1, w2_ref[...], preferred_element_type=jnp.float32)
    h2 = jnp.maximum(h2 + b2_ref[...], 0.0).astype(jnp.bfloat16)
    # Layer 3: (bt, 512) @ (512, 128)  (cols 10..127 are zero weights/bias)
    logits = jnp.dot(h2, w3_ref[...], preferred_element_type=jnp.float32)
    out_ref[...] = (logits + b3_ref[...]).astype(out_ref.dtype)


def _round_up(n, m):
    return ((n + m - 1) // m) * m


def _choose_batch_tile(B, b_tile_max):
    """Batch tile: multiple of 8, capped so B >= 16 gives a grid of >= 2 tiles
    (lets the 'parallel' axis shard across both TensorCores on v7x)."""
    if B <= 8:
        return 8
    half = -(-B // 2)                      # ceil(B / 2)
    return max(8, min(b_tile_max, _round_up(half, 8)))


def mlp_forward(x_nchw, params, *, b_tile_max=1024):
    """x_nchw: (B, 1, 28, 28) float32. Returns logits (B, 10) float32."""
    w1, b1, w2, b2, w3, b3 = params  # w1:(784,512) bf16, w3:(512,128) bf16, biases f32
    B = x_nchw.shape[0]

    # nn.Flatten: free metadata reshape for contiguous row-major input; stays f32.
    x = x_nchw.reshape(B, IN_FEATURES)

    bt = _choose_batch_tile(B, b_tile_max)
    b_pad = _round_up(B, bt)
    if b_pad != B:
        x = jnp.pad(x, ((0, b_pad - B), (0, 0)))
    grid = (b_pad // bt,)

    # Advisory cost for XLA scheduling around the custom call.
    flops = 2 * b_pad * (IN_FEATURES * HIDDEN + HIDDEN * HIDDEN + HIDDEN * N_PAD)
    bytes_accessed = (
        b_pad * IN_FEATURES * 4                       # f32 input read by the kernel
        + (w1.size + w2.size + w3.size) * 2           # bf16 weights (DMA'd once)
        + (b1.size + b2.size + b3.size) * 4           # f32 biases
        + b_pad * N_PAD * 4                           # f32 output
    )

    out = pl.pallas_call(
        mlp_kernel,
        out_shape=jax.ShapeDtypeStruct((b_pad, N_PAD), jnp.float32),
        grid=grid,
        in_specs=[
            pl.BlockSpec((bt, IN_FEATURES), lambda i: (i, 0)),    # x: tiled over batch
            pl.BlockSpec((IN_FEATURES, HIDDEN), lambda i: (0, 0)),  # w1: resident
            pl.BlockSpec((1, HIDDEN), lambda i: (0, 0)),          # b1
            pl.BlockSpec((HIDDEN, HIDDEN), lambda i: (0, 0)),     # w2
            pl.BlockSpec((1, HIDDEN), lambda i: (0, 0)),          # b2
            pl.BlockSpec((HIDDEN, N_PAD), lambda i: (0, 0)),      # w3 (lane-padded)
            pl.BlockSpec((1, N_PAD), lambda i: (0, 0)),           # b3 (lane-padded)
        ],
        out_specs=pl.BlockSpec((bt, N_PAD), lambda i: (i, 0)),
        compiler_params=pltpu.CompilerParams(
            dimension_semantics=("parallel",),        # shard batch tiles across TCs
            vmem_limit_bytes=32 * 1024 * 1024,        # raise v5e's 16 MiB default
        ),
        cost_estimate=pl.CostEstimate(
            flops=flops, transcendentals=0, bytes_accessed=bytes_accessed
        ),
    )(x, w1, b1, w2, b2, w3, b3)

    return out[:B, :OUT_FEATURES]


def init_params(key):
    """PyTorch-style Linear init; weights stored (in, out) in bf16.

    w3/b3 are zero-padded along N (10 -> 128) so the last store is lane-dense;
    zero pads do not change the logits.  Biases stay f32 (added to f32 acc).
    """
    k1, k2, k3, k4, k5, k6 = jax.random.split(key, 6)

    def uinit(k, shape, fan_in):
        bound = 1.0 / jnp.sqrt(fan_in)
        return jax.random.uniform(k, shape, jnp.float32, -bound, bound)

    w1 = uinit(k1, (IN_FEATURES, HIDDEN), IN_FEATURES)
    b1 = uinit(k2, (1, HIDDEN), IN_FEATURES)
    w2 = uinit(k3, (HIDDEN, HIDDEN), HIDDEN)
    b2 = uinit(k4, (1, HIDDEN), HIDDEN)
    w3 = uinit(k5, (HIDDEN, OUT_FEATURES), HIDDEN)
    b3 = uinit(k6, (1, OUT_FEATURES), HIDDEN)

    w3p = jnp.pad(w3, ((0, 0), (0, N_PAD - OUT_FEATURES))).astype(jnp.bfloat16)
    b3p = jnp.pad(b3, ((0, 0), (0, N_PAD - OUT_FEATURES)))
    return (w1.astype(jnp.bfloat16), b1, w2.astype(jnp.bfloat16), b2, w3p, b3p)


def mlp_reference(x_nchw, params):
    """Pure-JAX reference using the same bf16 weights / f32 accumulation."""
    w1, b1, w2, b2, w3, b3 = params
    x = x_nchw.reshape(x_nchw.shape[0], -1).astype(jnp.bfloat16)
    h1 = jnp.maximum(
        jnp.dot(x, w1, preferred_element_type=jnp.float32) + b1, 0.0
    ).astype(jnp.bfloat16)
    h2 = jnp.maximum(
        jnp.dot(h1, w2, preferred_element_type=jnp.float32) + b2, 0.0
    ).astype(jnp.bfloat16)
    logits = jnp.dot(h2, w3, preferred_element_type=jnp.float32) + b3
    return logits[:, :OUT_FEATURES]


if __name__ == "__main__":
    key = jax.random.PRNGKey(0)
    pkey, xkey, xkey2 = jax.random.split(key, 3)
    params = init_params(pkey)

    # Small batch, MNIST-shaped input implied by Linear(28*28, ...).
    x = jax.random.normal(xkey, (8, 1, 28, 28), jnp.float32)
    logits = jax.block_until_ready(mlp_forward(x, params))
    ref = mlp_reference(x, params)
    assert logits.shape == (8, 10)
    assert jnp.allclose(logits, ref, atol=5e-2, rtol=5e-2), (
        float(jnp.max(jnp.abs(logits - ref)))
    )

    # Second batch size exercising the multi-tile (grid >= 2) + batch-padding path.
    x2 = jax.random.normal(xkey2, (33, 1, 28, 28), jnp.float32)
    logits2 = jax.block_until_ready(mlp_forward(x2, params))
    ref2 = mlp_reference(x2, params)
    assert logits2.shape == (33, 10)
    assert jnp.allclose(logits2, ref2, atol=5e-2, rtol=5e-2), (
        float(jnp.max(jnp.abs(logits2 - ref2)))
    )

    print("KERNEL_OK")
</pallas_src>

<mosaic_0001>
module attributes {stable_mosaic.version = 11 : i64} {
  func.func @mlp_kernel(%arg0: i32, %arg1: memref<8x784xf32, #tpu.memory_space<vmem>>, %arg2: memref<784x512xbf16, #tpu.memory_space<vmem>>, %arg3: memref<1x512xf32, #tpu.memory_space<vmem>>, %arg4: memref<512x512xbf16, #tpu.memory_space<vmem>>, %arg5: memref<1x512xf32, #tpu.memory_space<vmem>>, %arg6: memref<512x128xbf16, #tpu.memory_space<vmem>>, %arg7: memref<1x128xf32, #tpu.memory_space<vmem>>, %arg8: memref<8x128xf32, #tpu.memory_space<vmem>>) attributes {dimension_semantics = [#tpu.dimension_semantics<parallel>], iteration_bounds = array<i64: 1>, scalar_prefetch = 0 : i64, scratch_operands = 0 : i64, tpu.core_type = #tpu.core_type<tc>, window_params = [{transform_indices = @transform_0, window_bounds = array<i64: 8, 784>}, {pipeline_mode = #tpu.pipeline_mode<synchronous>, transform_indices = @transform_1, window_bounds = array<i64: 784, 512>}, {pipeline_mode = #tpu.pipeline_mode<synchronous>, transform_indices = @transform_2, window_bounds = array<i64: 1, 512>}, {pipeline_mode = #tpu.pipeline_mode<synchronous>, transform_indices = @transform_3, window_bounds = array<i64: 512, 512>}, {pipeline_mode = #tpu.pipeline_mode<synchronous>, transform_indices = @transform_4, window_bounds = array<i64: 1, 512>}, {pipeline_mode = #tpu.pipeline_mode<synchronous>, transform_indices = @transform_5, window_bounds = array<i64: 512, 128>}, {pipeline_mode = #tpu.pipeline_mode<synchronous>, transform_indices = @transform_6, window_bounds = array<i64: 1, 128>}, {transform_indices = @transform_7, window_bounds = array<i64: 8, 128>}]} {
    %c0 = arith.constant 0 : index
    %c0_0 = arith.constant 0 : index
    %0 = vector.load %arg1[%c0, %c0_0] : memref<8x784xf32, #tpu.memory_space<vmem>>, vector<8x784xf32>
    %1 = arith.truncf %0 : vector<8x784xf32> to vector<8x784xbf16>
    %c0_1 = arith.constant 0 : index
    %c0_2 = arith.constant 0 : index
    %2 = vector.load %arg2[%c0_1, %c0_2] : memref<784x512xbf16, #tpu.memory_space<vmem>>, vector<784x512xbf16>
    %cst = arith.constant dense<0.000000e+00> : vector<8x512xf32>
    %3 = tpu.matmul %1, %2, %cst {dimension_numbers = #tpu.dot_dimension_numbers<[1], [0], [0], [1], [0, 0, 1, 1], [], []>} : vector<8x784xbf16>, vector<784x512xbf16>, vector<8x512xf32> -> vector<8x512xf32>
    %c0_3 = arith.constant 0 : index
    %c0_4 = arith.constant 0 : index
    %4 = vector.load %arg3[%c0_3, %c0_4] : memref<1x512xf32, #tpu.memory_space<vmem>>, vector<1x512xf32>
    %5 = vector.broadcast %4 : vector<1x512xf32> to vector<8x512xf32>
    %6 = arith.addf %3, %5 : vector<8x512xf32>
    %cst_5 = arith.constant 0.000000e+00 : f32
    %7 = vector.broadcast %cst_5 : f32 to vector<8x512xf32>
    %8 = arith.maximumf %6, %7 : vector<8x512xf32>
    %9 = arith.truncf %8 : vector<8x512xf32> to vector<8x512xbf16>
    %c0_6 = arith.constant 0 : index
    %c0_7 = arith.constant 0 : index
    %10 = vector.load %arg4[%c0_6, %c0_7] : memref<512x512xbf16, #tpu.memory_space<vmem>>, vector<512x512xbf16>
    %cst_8 = arith.constant dense<0.000000e+00> : vector<8x512xf32>
    %11 = tpu.matmul %9, %10, %cst_8 {dimension_numbers = #tpu.dot_dimension_numbers<[1], [0], [0], [1], [0, 0, 1, 1], [], []>} : vector<8x512xbf16>, vector<512x512xbf16>, vector<8x512xf32> -> vector<8x512xf32>
    %c0_9 = arith.constant 0 : index
    %c0_10 = arith.constant 0 : index
    %12 = vector.load %arg5[%c0_9, %c0_10] : memref<1x512xf32, #tpu.memory_space<vmem>>, vector<1x512xf32>
    %13 = vector.broadcast %12 : vector<1x512xf32> to vector<8x512xf32>
    %14 = arith.addf %11, %13 : vector<8x512xf32>
    %cst_11 = arith.constant 0.000000e+00 : f32
    %15 = vector.broadcast %cst_11 : f32 to vector<8x512xf32>
    %16 = arith.maximumf %14, %15 : vector<8x512xf32>
    %17 = arith.truncf %16 : vector<8x512xf32> to vector<8x512xbf16>
    %c0_12 = arith.constant 0 : index
    %c0_13 = arith.constant 0 : index
    %18 = vector.load %arg6[%c0_12, %c0_13] : memref<512x128xbf16, #tpu.memory_space<vmem>>, vector<512x128xbf16>
    %cst_14 = arith.constant dense<0.000000e+00> : vector<8x128xf32>
    %19 = tpu.matmul %17, %18, %cst_14 {dimension_numbers = #tpu.dot_dimension_numbers<[1], [0], [0], [1], [0, 0, 1, 1], [], []>} : vector<8x512xbf16>, vector<512x128xbf16>, vector<8x128xf32> -> vector<8x128xf32>
    %c0_15 = arith.constant 0 : index
    %c0_16 = arith.constant 0 : index
    %20 = vector.load %arg7[%c0_15, %c0_16] : memref<1x128xf32, #tpu.memory_space<vmem>>, vector<1x128xf32>
    %21 = vector.broadcast %20 : vector<1x128xf32> to vector<8x128xf32>
    %22 = arith.addf %19, %21 : vector<8x128xf32>
    %c0_17 = arith.constant 0 : index
    %c0_18 = arith.constant 0 : index
    %23 = vector.load %arg8[%c0_17, %c0_18] : memref<8x128xf32, #tpu.memory_space<vmem>>, vector<8x128xf32>
    tpu.vector_store %arg8[%c0_17, %c0_18], %22 {strides = array<i32>} : memref<8x128xf32, #tpu.memory_space<vmem>>, vector<8x128xf32>,
    return
  }
  func.func @transform_0(%arg0: i32) -> (i32, i32) {
    %c0_i32 = arith.constant 0 : i32
    %c0_i32_0 = arith.constant 0 : i32
    return %arg0, %c0_i32 : i32, i32
  }
  func.func @transform_1(%arg0: i32) -> (i32, i32) {
    %c0_i32 = arith.constant 0 : i32
    %c0_i32_0 = arith.constant 0 : i32
    %c0_i32_1 = arith.constant 0 : i32
    return %c0_i32, %c0_i32_0 : i32, i32
  }
  func.func @transform_2(%arg0: i32) -> (i32, i32) {
    %c0_i32 = arith.constant 0 : i32
    %c0_i32_0 = arith.constant 0 : i32
    %c0_i32_1 = arith.constant 0 : i32
    return %c0_i32, %c0_i32_0 : i32, i32
  }
  func.func @transform_3(%arg0: i32) -> (i32, i32) {
    %c0_i32 = arith.constant 0 : i32
    %c0_i32_0 = arith.constant 0 : i32
    %c0_i32_1 = arith.constant 0 : i32
    return %c0_i32, %c0_i32_0 : i32, i32
  }
  func.func @transform_4(%arg0: i32) -> (i32, i32) {
    %c0_i32 = arith.constant 0 : i32
    %c0_i32_0 = arith.constant 0 : i32
    %c0_i32_1 = arith.constant 0 : i32
    return %c0_i32, %c0_i32_0 : i32, i32
  }
  func.func @transform_5(%arg0: i32) -> (i32, i32) {
    %c0_i32 = arith.constant 0 : i32
    %c0_i32_0 = arith.constant 0 : i32
    %c0_i32_1 = arith.constant 0 : i32
    return %c0_i32, %c0_i32_0 : i32, i32
  }
  func.func @transform_6(%arg0: i32) -> (i32, i32) {
    %c0_i32 = arith.constant 0 : i32
    %c0_i32_0 = arith.constant 0 : i32
    %c0_i32_1 = arith.constant 0 : i32
    return %c0_i32, %c0_i32_0 : i32, i32
  }
  func.func @transform_7(%arg0: i32) -> (i32, i32) {
    %c0_i32 = arith.constant 0 : i32
    %c0_i32_0 = arith.constant 0 : i32
    return %arg0, %c0_i32 : i32, i32
  }
}

</mosaic_0001>

<llo_original>
// kernel: tpu_custom_call.1
$region0: #{tpu_custom_call.1}
  #allocation0 [shape = 'u32[]', space=smem, size = 0x4, offset = 0x4, fixed_abs, tag = 'smem constant byte address 0x4 - core index']
  #allocation1 [shape = 'u32[144,128]{1,0:T(1,128)}', space=vmem, size = 0x12000, scoped, tag = 'internal scratch']
  %s0 = inlined_call_operand.hbm [shape: f32[8,784], index: 0, kind: input, shape index: {}]
  %s1 = inlined_call_operand.hbm [shape: bf16[784,512], index: 1, kind: input, shape index: {}]
  %s2 = inlined_call_operand.hbm [shape: f32[1,512], index: 2, kind: input, shape index: {}]
  %s3 = inlined_call_operand.hbm [shape: bf16[512,512], index: 3, kind: input, shape index: {}]
  %s4 = inlined_call_operand.vmem [shape: f32[1,512], index: 4, kind: input, shape index: {}]
  %s5 = inlined_call_operand.hbm [shape: bf16[512,128], index: 5, kind: input, shape index: {}]
  %s6 = inlined_call_operand.vmem [shape: f32[1,128], index: 6, kind: input, shape index: {}]
  %s7 = inlined_call_operand.hbm [shape: f32[8,128], index: 7, kind: output, shape index: {}]
  %s8 = sld [smem:[#allocation0]]
  $region58: #{tpu_custom_call.1} parent=0
    _
  %s10 = ssub.s32 1, %s8
  %s11 = scalar_select 0, %s10, %s8
  $region1: #{tpu_custom_call.1} parent=0
    #allocation2 [shape = 'u8[28672]{0}', space=vmem, size = 0x7000, scoped, tag = 'input window, operand 0, single buffered']
    #allocation3 [shape = 's32[1]{0}', space=sflag, size = 0x4, scoped, tag = 'scoped memory for tpu_custom_call.1']
    #allocation4 [shape = 's32[1]{0}', space=sflag, size = 0x4, scoped, tag = 'scoped memory for tpu_custom_call.1']
    #allocation5 [shape = 'u8[802816]{0}', space=vmem, size = 0xc4000, scoped, tag = 'input window, operand 1, single buffered']
    #allocation6 [shape = 's32[1]{0}', space=sflag, size = 0x4, scoped, tag = 'scoped memory for tpu_custom_call.1']
    #allocation7 [shape = 'u8[2048]{0}', space=vmem, size = 0x800, scoped, tag = 'input window, operand 2, single buffered']
    #allocation8 [shape = 'u8[524288]{0}', space=vmem, size = 0x80000, scoped, tag = 'input window, operand 3, single buffered']
    #allocation9 [shape = 's32[1]{0}', space=sflag, size = 0x4, scoped, tag = 'scoped memory for tpu_custom_call.1']
    #allocation10 [shape = 'u8[131072]{0}', space=vmem, size = 0x20000, scoped, tag = 'input window, operand 5, single buffered']
    #allocation11 [shape = 'u8[4096]{0}', space=vmem, size = 0x1000, scoped, tag = 'output window, operand 0, single buffered']
    %12 = vsyncpa [#allocation3], 0
    %13 = vsyncpa [#allocation6], 0
    %14 = vsyncpa [#allocation9], 0
    %15 = vsyncpa [#allocation4], 0
    // Predicated region
    $region2: #{tpu_custom_call.1} parent=1 // pred_check
      _
    $region3: #{tpu_custom_call.1} parent=1 // pred_check_branch
      %17 = sbr.rel (0) target = $region5
    $region4: #{tpu_custom_call.1} parent=1 // pred_region
      %s19 = ssub.s32 896, 896
      %20 = vsyncadd [#allocation3], %s19
      %s22 = sshll.u32 [#allocation2], 4
      %s23 = int_to_ptr.vmem [resolvable:$true] %s22
      %25 = dma.hbm_to_vmem [thread:$0]  %s0, 896, %s23, [#allocation3]
    $region5: #{tpu_custom_call.1} parent=1 // pred_fallthru
      _
    // Predicated region
    $region6: #{tpu_custom_call.1} parent=1 // pred_check
      _
    $region7: #{tpu_custom_call.1} parent=1 // pred_check_branch
      %27 = sbr.rel (0) target = $region9
    $region8: #{tpu_custom_call.1} parent=1 // pred_region
      %s29 = ssub.s32 25088, 25088
      %30 = vsyncadd [#allocation6], %s29
      %s31 = sshll.u32 [#allocation5], 4
      %s32 = int_to_ptr.vmem [resolvable:$true] %s31
      %37 = dma.hbm_to_vmem [thread:$0]  %s1, 25088, %s32, [#allocation6], 256, 256, 16
    $region9: #{tpu_custom_call.1} parent=1 // pred_fallthru
      _
    // Predicated region
    $region10: #{tpu_custom_call.1} parent=1 // pred_check
      _
    $region11: #{tpu_custom_call.1} parent=1 // pred_check_branch
      %39 = sbr.rel (0) target = $region13
    $region12: #{tpu_custom_call.1} parent=1 // pred_region
      %s41 = ssub.s32 64, 64
      %42 = vsyncadd [#allocation6], %s41
      %s44 = sshll.u32 [#allocation7], 4
      %s45 = int_to_ptr.vmem [resolvable:$true] %s44
      %47 = dma.hbm_to_vmem [thread:$0]  %s2, 64, %s45, [#allocation6]
    $region13: #{tpu_custom_call.1} parent=1 // pred_fallthru
      _
    // Predicated region
    $region14: #{tpu_custom_call.1} parent=1 // pred_check
      _
    $region15: #{tpu_custom_call.1} parent=1 // pred_check_branch
      %49 = sbr.rel (0) target = $region17
    $region16: #{tpu_custom_call.1} parent=1 // pred_region
      %s51 = ssub.s32 16384, 16384
      %52 = vsyncadd [#allocation9], %s51
      %s53 = sshll.u32 [#allocation8], 4
      %s54 = int_to_ptr.vmem [resolvable:$true] %s53
      %59 = dma.hbm_to_vmem [thread:$0]  %s3, 16384, %s54, [#allocation9], 256, 256, 16
    $region17: #{tpu_custom_call.1} parent=1 // pred_fallthru
      _
    // Predicated region
    $region18: #{tpu_custom_call.1} parent=1 // pred_check
      _
    $region19: #{tpu_custom_call.1} parent=1 // pred_check_branch
      %61 = sbr.rel (0) target = $region21
    $region20: #{tpu_custom_call.1} parent=1 // pred_region
      _
    $region21: #{tpu_custom_call.1} parent=1 // pred_fallthru
      _
    // Predicated region
    $region22: #{tpu_custom_call.1} parent=1 // pred_check
      _
    $region23: #{tpu_custom_call.1} parent=1 // pred_check_branch
      %63 = sbr.rel (0) target = $region25
    $region24: #{tpu_custom_call.1} parent=1 // pred_region
      %s65 = ssub.s32 4096, 4096
      %66 = vsyncadd [#allocation9], %s65
      %s67 = sshll.u32 [#allocation10], 4
      %s68 = int_to_ptr.vmem [resolvable:$true] %s67
      %73 = dma.hbm_to_vmem [thread:$0]  %s5, 4096, %s68, [#allocation9], 64, 64, 4
    $region25: #{tpu_custom_call.1} parent=1 // pred_fallthru
      _
    // Predicated region
    $region26: #{tpu_custom_call.1} parent=1 // pred_check
      _
    $region27: #{tpu_custom_call.1} parent=1 // pred_check_branch
      %75 = sbr.rel (0) target = $region29
    $region28: #{tpu_custom_call.1} parent=1 // pred_region
      _
    $region29: #{tpu_custom_call.1} parent=1 // pred_fallthru
      _
    // Predicated region
    $region30: #{tpu_custom_call.1} parent=1 // pred_check
      _
    $region31: #{tpu_custom_call.1} parent=1 // pred_check_branch
      %77 = sbr.rel (0) target = $region33
    $region32: #{tpu_custom_call.1} parent=1 // pred_region
      %78 = dma.done [#allocation3], 896
    $region33: #{tpu_custom_call.1} parent=1 // pred_fallthru
      _
    // Predicated region
    $region34: #{tpu_custom_call.1} parent=1 // pred_check
      _
    $region35: #{tpu_custom_call.1} parent=1 // pred_check_branch
      %80 = sbr.rel (0) target = $region37
    $region36: #{tpu_custom_call.1} parent=1 // pred_region
      %81 = dma.done [#allocation6], 25088
    $region37: #{tpu_custom_call.1} parent=1 // pred_fallthru
      _
    // Predicated region
    $region38: #{tpu_custom_call.1} parent=1 // pred_check
      _
    $region39: #{tpu_custom_call.1} parent=1 // pred_check_branch
      %83 = sbr.rel (0) target = $region41
    $region40: #{tpu_custom_call.1} parent=1 // pred_region
      %84 = dma.done [#allocation6], 64
    $region41: #{tpu_custom_call.1} parent=1 // pred_fallthru
      _
    // Predicated region
    $region42: #{tpu_custom_call.1} parent=1 // pred_check
      _
    $region43: #{tpu_custom_call.1} parent=1 // pred_check_branch
      %86 = sbr.rel (0) target = $region45
    $region44: #{tpu_custom_call.1} parent=1 // pred_region
      %87 = dma.done [#allocation9], 16384
    $region45: #{tpu_custom_call.1} parent=1 // pred_fallthru
      _
    // Predicated region
    $region46: #{tpu_custom_call.1} parent=1 // pred_check
      _
    $region47: #{tpu_custom_call.1} parent=1 // pred_check_branch
      %89 = sbr.rel (0) target = $region49
    $region48: #{tpu_custom_call.1} parent=1 // pred_region
      %90 = dma.done [#allocation9], 4096
    $region49: #{tpu_custom_call.1} parent=1 // pred_fallthru
      _
    %v92 = vld [vmem:[#allocation2] sm:$0xff]
    %v93 = vld [vmem:[#allocation2 + $0x8] sm:$0xff]
    %v94 = vld [vmem:[#allocation2 + $0x10] sm:$0xff]
    %v95 = vld [vmem:[#allocation2 + $0x18] sm:$0xff]
    %v96 = vld [vmem:[#allocation2 + $0x20] sm:$0xff]
    %v97 = vld [vmem:[#allocation2 + $0x28] sm:$0xff]
    %v98 = vld [vmem:[#allocation2 + $0x30] sm:$0xff]
    %v99 = vpack.c.bf16 %v92, %v92
    %v100 = vpack.c.bf16 %v93, %v93
    %v101 = vpack.c.bf16 %v94, %v94
    %v102 = vpack.c.bf16 %v95, %v95
    %v103 = vpack.c.bf16 %v96, %v96
    %v104 = vpack.c.bf16 %v97, %v97
    %v105 = vpack.c.bf16 %v98, %v98
    %v106 = vld [vmem:[#allocation5] sm:$0xff]
    %v107 = vld [vmem:[#allocation5 + $0x8] sm:$0xff]
    %v108 = vld [vmem:[#allocation5 + $0x10] sm:$0xff]
    %v109 = vld [vmem:[#allocation5 + $0x18] sm:$0xff]
    %v110 = vld [vmem:[#allocation5 + $0x20] sm:$0xff]
    %v111 = vld [vmem:[#allocation5 + $0x28] sm:$0xff]
    %v112 = vld [vmem:[#allocation5 + $0x30] sm:$0xff]
    %v113 = vld [vmem:[#allocation5 + $0x38] sm:$0xff]
    %v114 = vld [vmem:[#allocation5 + $0x40] sm:$0xff]
    %v115 = vld [vmem:[#allocation5 + $0x48] sm:$0xff]
    %v116 = vld [vmem:[#allocation5 + $0x50] sm:$0xff]
    %v117 = vld [vmem:[#allocation5 + $0x58] sm:$0xff]
    %v118 = vld [vmem:[#allocation5 + $0x60] sm:$0xff]
    %v119 = vld [vmem:[#allocation5 + $0x68] sm:$0xff]
    %v120 = vld [vmem:[#allocation5 + $0x70] sm:$0xff]
    %v121 = vld [vmem:[#allocation5 + $0x78] sm:$0xff]
    %v122 = vld [vmem:[#allocation5 + $0x80] sm:$0xff]
    %v123 = vld [vmem:[#allocation5 + $0x88] sm:$0xff]
    %v124 = vld [vmem:[#allocation5 + $0x90] sm:$0xff]
    %v125 = vld [vmem:[#allocation5 + $0x98] sm:$0xff]
    %v126 = vld [vmem:[#allocation5 + $0xa0] sm:$0xff]
    %v127 = vld [vmem:[#allocation5 + $0xa8] sm:$0xff]
    %v128 = vld [vmem:[#allocation5 + $0xb0] sm:$0xff]
    %v129 = vld [vmem:[#allocation5 + $0xb8] sm:$0xff]
    %v130 = vld [vmem:[#allocation5 + $0xc0] sm:$0xff]
    %v131 = vld [vmem:[#allocation5 + $0xc8] sm:$0xff]
    %v132 = vld [vmem:[#allocation5 + $0xd0] sm:$0xff]
    %v133 = vld [vmem:[#allocation5 + $0xd8] sm:$0xff]
    %v134 = vld [vmem:[#allocation5 + $0xe0] sm:$0xff]
    %v135 = vld [vmem:[#allocation5 + $0xe8] sm:$0xff]
    %v136 = vld [vmem:[#allocation5 + $0xf0] sm:$0xff]
    %v137 = vld [vmem:[#allocation5 + $0xf8] sm:$0xff]
    %v138 = vld [vmem:[#allocation5 + $0x100] sm:$0xff]
    %v139 = vld [vmem:[#allocation5 + $0x108] sm:$0xff]
    %v140 = vld [vmem:[#allocation5 + $0x110] sm:$0xff]
    %v141 = vld [vmem:[#allocation5 + $0x118] sm:$0xff]
    %v142 = vld [vmem:[#allocation5 + $0x120] sm:$0xff]
    %v143 = vld [vmem:[#allocation5 + $0x128] sm:$0xff]
    %v144 = vld [vmem:[#allocation5 + $0x130] sm:$0xff]
    %v145 = vld [vmem:[#allocation5 + $0x138] sm:$0xff]
    %v146 = vld [vmem:[#allocation5 + $0x140] sm:$0xff]
    %v147 = vld [vmem:[#allocation5 + $0x148] sm:$0xff]
    %v148 = vld [vmem:[#allocation5 + $0x150] sm:$0xff]
    %v149 = vld [vmem:[#allocation5 + $0x158] sm:$0xff]
    %v150 = vld [vmem:[#allocation5 + $0x160] sm:$0xff]
    %v151 = vld [vmem:[#allocation5 + $0x168] sm:$0xff]
    %v152 = vld [vmem:[#allocation5 + $0x170] sm:$0xff]
    %v153 = vld [vmem:[#allocation5 + $0x178] sm:$0xff]
    %v154 = vld [vmem:[#allocation5 + $0x180] sm:$0xff]
    %v155 = vld [vmem:[#allocation5 + $0x188] sm:$0xff]
    %v156 = vld [vmem:[#allocation5 + $0x190] sm:$0xff]
    %v157 = vld [vmem:[#allocation5 + $0x198] sm:$0xff]
    %v158 = vld [vmem:[#allocation5 + $0x1a0] sm:$0xff]
    %v159 = vld [vmem:[#allocation5 + $0x1a8] sm:$0xff]
    %v160 = vld [vmem:[#allocation5 + $0x1b0] sm:$0xff]
    %v161 = vld [vmem:[#allocation5 + $0x1b8] sm:$0xff]
    %v162 = vld [vmem:[#allocation5 + $0x1c0] sm:$0xff]
    %v163 = vld [vmem:[#allocation5 + $0x1c8] sm:$0xff]
    %v164 = vld [vmem:[#allocation5 + $0x1d0] sm:$0xff]
    %v165 = vld [vmem:[#allocation5 + $0x1d8] sm:$0xff]
    %v166 = vld [vmem:[#allocation5 + $0x1e0] sm:$0xff]
    %v167 = vld [vmem:[#allocation5 + $0x1e8] sm:$0xff]
    %v168 = vld [vmem:[#allocation5 + $0x1f0] sm:$0xff]
    %v169 = vld [vmem:[#allocation5 + $0x1f8] sm:$0xff]
    %v170 = vld [vmem:[#allocation5 + $0x200] sm:$0xff]
    %v171 = vld [vmem:[#allocation5 + $0x208] sm:$0xff]
    %v172 = vld [vmem:[#allocation5 + $0x210] sm:$0xff]
    %v173 = vld [vmem:[#allocation5 + $0x218] sm:$0xff]
    %v174 = vld [vmem:[#allocation5 + $0x220] sm:$0xff]
    %v175 = vld [vmem:[#allocation5 + $0x228] sm:$0xff]
    %v176 = vld [vmem:[#allocation5 + $0x230] sm:$0xff]
    %v177 = vld [vmem:[#allocation5 + $0x238] sm:$0xff]
    %v178 = vld [vmem:[#allocation5 + $0x240] sm:$0xff]
    %v179 = vld [vmem:[#allocation5 + $0x248] sm:$0xff]
    %v180 = vld [vmem:[#allocation5 + $0x250] sm:$0xff]
    %v181 = vld [vmem:[#allocation5 + $0x258] sm:$0xff]
    %v182 = vld [vmem:[#allocation5 + $0x260] sm:$0xff]
    %v183 = vld [vmem:[#allocation5 + $0x268] sm:$0xff]
    %v184 = vld [vmem:[#allocation5 + $0x270] sm:$0xff]
    %v185 = vld [vmem:[#allocation5 + $0x278] sm:$0xff]
    %v186 = vld [vmem:[#allocation5 + $0x280] sm:$0xff]
    %v187 = vld [vmem:[#allocation5 + $0x288] sm:$0xff]
    %v188 = vld [vmem:[#allocation5 + $0x290] sm:$0xff]
    %v189 = vld [vmem:[#allocation5 + $0x298] sm:$0xff]
    %v190 = vld [vmem:[#allocation5 + $0x2a0] sm:$0xff]
    %v191 = vld [vmem:[#allocation5 + $0x2a8] sm:$0xff]
    %v192 = vld [vmem:[#allocation5 + $0x2b0] sm:$0xff]
    %v193 = vld [vmem:[#allocation5 + $0x2b8] sm:$0xff]
    %v194 = vld [vmem:[#allocation5 + $0x2c0] sm:$0xff]
    %v195 = vld [vmem:[#allocation5 + $0x2c8] sm:$0xff]
    %v196 = vld [vmem:[#allocation5 + $0x2d0] sm:$0xff]
    %v197 = vld [vmem:[#allocation5 + $0x2d8] sm:$0xff]
    %v198 = vld [vmem:[#allocation5 + $0x2e0] sm:$0xff]
    %v199 = vld [vmem:[#allocation5 + $0x2e8] sm:$0xff]
    %v200 = vld [vmem:[#allocation5 + $0x2f0] sm:$0xff]
    %v201 = vld [vmem:[#allocation5 + $0x2f8] sm:$0xff]
    %v202 = vld [vmem:[#allocation5 + $0x300] sm:$0xff]
    %v203 = vld [vmem:[#allocation5 + $0x308] sm:$0xff]
    %v204 = vld [vmem:[#allocation5 + $0x310] sm:$0xff]
    %v205 = vld [vmem:[#allocation5 + $0x318] sm:$0xff]
    %v206 = vld [vmem:[#allocation5 + $0x320] sm:$0xff]
    %v207 = vld [vmem:[#allocation5 + $0x328] sm:$0xff]
    %v208 = vld [vmem:[#allocation5 + $0x330] sm:$0xff]
    %v209 = vld [vmem:[#allocation5 + $0x338] sm:$0xff]
    %v210 = vld [vmem:[#allocation5 + $0x340] sm:$0xff]
    %v211 = vld [vmem:[#allocation5 + $0x348] sm:$0xff]
    %v212 = vld [vmem:[#allocation5 + $0x350] sm:$0xff]
    %v213 = vld [vmem:[#allocation5 + $0x358] sm:$0xff]
    %v214 = vld [vmem:[#allocation5 + $0x360] sm:$0xff]
    %v215 = vld [vmem:[#allocation5 + $0x368] sm:$0xff]
    %v216 = vld [vmem:[#allocation5 + $0x370] sm:$0xff]
    %v217 = vld [vmem:[#allocation5 + $0x378] sm:$0xff]
    %v218 = vld [vmem:[#allocation5 + $0x380] sm:$0xff]
    %v219 = vld [vmem:[#allocation5 + $0x388] sm:$0xff]
    %v220 = vld [vmem:[#allocation5 + $0x390] sm:$0xff]
    %v221 = vld [vmem:[#allocation5 + $0x398] sm:$0xff]
    %v222 = vld [vmem:[#allocation5 + $0x3a0] sm:$0xff]
    %v223 = vld [vmem:[#allocation5 + $0x3a8] sm:$0xff]
    %v224 = vld [vmem:[#allocation5 + $0x3b0] sm:$0xff]
    %v225 = vld [vmem:[#allocation5 + $0x3b8] sm:$0xff]
    %v226 = vld [vmem:[#allocation5 + $0x3c0] sm:$0xff]
    %v227 = vld [vmem:[#allocation5 + $0x3c8] sm:$0xff]
    %v228 = vld [vmem:[#allocation5 + $0x3d0] sm:$0xff]
    %v229 = vld [vmem:[#allocation5 + $0x3d8] sm:$0xff]
    %v230 = vld [vmem:[#allocation5 + $0x3e0] sm:$0xff]
    %v231 = vld [vmem:[#allocation5 + $0x3e8] sm:$0xff]
    %v232 = vld [vmem:[#allocation5 + $0x3f0] sm:$0xff]
    %v233 = vld [vmem:[#allocation5 + $0x3f8] sm:$0xff]
    %v234 = vld [vmem:[#allocation5 + $0x400] sm:$0xff]
    %v235 = vld [vmem:[#allocation5 + $0x408] sm:$0xff]
    %v236 = vld [vmem:[#allocation5 + $0x410] sm:$0xff]
    %v237 = vld [vmem:[#allocation5 + $0x418] sm:$0xff]
    %v238 = vld [vmem:[#allocation5 + $0x420] sm:$0xff]
    %v239 = vld [vmem:[#allocation5 + $0x428] sm:$0xff]
    %v240 = vld [vmem:[#allocation5 + $0x430] sm:$0xff]
    %v241 = vld [vmem:[#allocation5 + $0x438] sm:$0xff]
    %v242 = vld [vmem:[#allocation5 + $0x440] sm:$0xff]
    %v243 = vld [vmem:[#allocation5 + $0x448] sm:$0xff]
    %v244 = vld [vmem:[#allocation5 + $0x450] sm:$0xff]
    %v245 = vld [vmem:[#allocation5 + $0x458] sm:$0xff]
    %v246 = vld [vmem:[#allocation5 + $0x460] sm:$0xff]
    %v247 = vld [vmem:[#allocation5 + $0x468] sm:$0xff]
    %v248 = vld [vmem:[#allocation5 + $0x470] sm:$0xff]
    %v249 = vld [vmem:[#allocation5 + $0x478] sm:$0xff]
    %v250 = vld [vmem:[#allocation5 + $0x480] sm:$0xff]
    %v251 = vld [vmem:[#allocation5 + $0x488] sm:$0xff]
    %v252 = vld [vmem:[#allocation5 + $0x490] sm:$0xff]
    %v253 = vld [vmem:[#allocation5 + $0x498] sm:$0xff]
    %v254 = vld [vmem:[#allocation5 + $0x4a0] sm:$0xff]
    %v255 = vld [vmem:[#allocation5 + $0x4a8] sm:$0xff]
    %v256 = vld [vmem:[#allocation5 + $0x4b0] sm:$0xff]
    %v257 = vld [vmem:[#allocation5 + $0x4b8] sm:$0xff]
    %v258 = vld [vmem:[#allocation5 + $0x4c0] sm:$0xff]
    %v259 = vld [vmem:[#allocation5 + $0x4c8] sm:$0xff]
    %v260 = vld [vmem:[#allocation5 + $0x4d0] sm:$0xff]
    %v261 = vld [vmem:[#allocation5 + $0x4d8] sm:$0xff]
    %v262 = vld [vmem:[#allocation5 + $0x4e0] sm:$0xff]
    %v263 = vld [vmem:[#allocation5 + $0x4e8] sm:$0xff]
    %v264 = vld [vmem:[#allocation5 + $0x4f0] sm:$0xff]
    %v265 = vld [vmem:[#allocation5 + $0x4f8] sm:$0xff]
    %v266 = vld [vmem:[#allocation5 + $0x500] sm:$0xff]
    %v267 = vld [vmem:[#allocation5 + $0x508] sm:$0xff]
    %v268 = vld [vmem:[#allocation5 + $0x510] sm:$0xff]
    %v269 = vld [vmem:[#allocation5 + $0x518] sm:$0xff]
    %v270 = vld [vmem:[#allocation5 + $0x520] sm:$0xff]
    %v271 = vld [vmem:[#allocation5 + $0x528] sm:$0xff]
    %v272 = vld [vmem:[#allocation5 + $0x530] sm:$0xff]
    %v273 = vld [vmem:[#allocation5 + $0x538] sm:$0xff]
    %v274 = vld [vmem:[#allocation5 + $0x540] sm:$0xff]
    %v275 = vld [vmem:[#allocation5 + $0x548] sm:$0xff]
    %v276 = vld [vmem:[#allocation5 + $0x550] sm:$0xff]
    %v277 = vld [vmem:[#allocation5 + $0x558] sm:$0xff]
    %v278 = vld [vmem:[#allocation5 + $0x560] sm:$0xff]
    %v279 = vld [vmem:[#allocation5 + $0x568] sm:$0xff]
    %v280 = vld [vmem:[#allocation5 + $0x570] sm:$0xff]
    %v281 = vld [vmem:[#allocation5 + $0x578] sm:$0xff]
    %v282 = vld [vmem:[#allocation5 + $0x580] sm:$0xff]
    %v283 = vld [vmem:[#allocation5 + $0x588] sm:$0xff]
    %v284 = vld [vmem:[#allocation5 + $0x590] sm:$0xff]
    %v285 = vld [vmem:[#allocation5 + $0x598] sm:$0xff]
    %v286 = vld [vmem:[#allocation5 + $0x5a0] sm:$0xff]
    %v287 = vld [vmem:[#allocation5 + $0x5a8] sm:$0xff]
    %v288 = vld [vmem:[#allocation5 + $0x5b0] sm:$0xff]
    %v289 = vld [vmem:[#allocation5 + $0x5b8] sm:$0xff]
    %v290 = vld [vmem:[#allocation5 + $0x5c0] sm:$0xff]
    %v291 = vld [vmem:[#allocation5 + $0x5c8] sm:$0xff]
    %v292 = vld [vmem:[#allocation5 + $0x5d0] sm:$0xff]
    %v293 = vld [vmem:[#allocation5 + $0x5d8] sm:$0xff]
    %v294 = vld [vmem:[#allocation5 + $0x5e0] sm:$0xff]
    %v295 = vld [vmem:[#allocation5 + $0x5e8] sm:$0xff]
    %v296 = vld [vmem:[#allocation5 + $0x5f0] sm:$0xff]
    %v297 = vld [vmem:[#allocation5 + $0x5f8] sm:$0xff]
    %v298 = vld [vmem:[#allocation5 + $0x600] sm:$0xff]
    %v299 = vld [vmem:[#allocation5 + $0x608] sm:$0xff]
    %v300 = vld [vmem:[#allocation5 + $0x610] sm:$0xff]
    %v301 = vld [vmem:[#allocation5 + $0x618] sm:$0xff]
    %v302 = vld [vmem:[#allocation7] sm:$0xf]
    %v304 = vlaneseq
    %v305 = vshrl.u32 %v304, 7
    %v306 = vsub.s32 0, %v305
    %v307 = vrot.slane %v302, %v306
    %v308 = vlaneseq
    %v309 = vshrl.u32 %v308, 7
    %v310 = vsub.s32 1, %v309
    %v311 = vrot.slane %v302, %v310
    %v312 = vlaneseq
    %v313 = vshrl.u32 %v312, 7
    %v314 = vsub.s32 2, %v313
    %v315 = vrot.slane %v302, %v314
    %v316 = vlaneseq
    %v317 = vshrl.u32 %v316, 7
    %v318 = vsub.s32 3, %v317
    %v319 = vrot.slane %v302, %v318
    %v520 = vunpack.c.l.b16 %v106
    %v521 = vunpack.c.h.b16 %v106
    %v522 = vunpack.c.l.b16 %v107
    %v523 = vunpack.c.h.b16 %v107
    %v524 = vunpack.c.l.b16 %v108
    %v525 = vunpack.c.h.b16 %v108
    %v526 = vunpack.c.l.b16 %v109
    %v527 = vunpack.c.h.b16 %v109
    %v528 = vunpack.c.l.b16 %v110
    %v529 = vunpack.c.h.b16 %v110
    %v530 = vunpack.c.l.b16 %v111
    %v531 = vunpack.c.h.b16 %v111
    %v532 = vunpack.c.l.b16 %v112
    %v533 = vunpack.c.h.b16 %v112
    %v534 = vunpack.c.l.b16 %v113
    %v535 = vunpack.c.h.b16 %v113
    %v536 = vunpack.c.l.b16 %v114
    %v537 = vunpack.c.h.b16 %v114
    %v538 = vunpack.c.l.b16 %v115
    %v539 = vunpack.c.h.b16 %v115
    %v540 = vunpack.c.l.b16 %v116
    %v541 = vunpack.c.h.b16 %v116
    %v542 = vunpack.c.l.b16 %v117
    %v543 = vunpack.c.h.b16 %v117
    %v544 = vunpack.c.l.b16 %v118
    %v545 = vunpack.c.h.b16 %v118
    %v546 = vunpack.c.l.b16 %v119
    %v547 = vunpack.c.h.b16 %v119
    %v548 = vunpack.c.l.b16 %v120
    %v549 = vunpack.c.h.b16 %v120
    %v550 = vunpack.c.l.b16 %v121
    %v551 = vunpack.c.h.b16 %v121
    %v552 = vunpack.c.l.b16 %v122
    %v553 = vunpack.c.h.b16 %v122
    %v554 = vunpack.c.l.b16 %v123
    %v555 = vunpack.c.h.b16 %v123
    %v556 = vunpack.c.l.b16 %v124
    %v557 = vunpack.c.h.b16 %v124
    %v558 = vunpack.c.l.b16 %v125
    %v559 = vunpack.c.h.b16 %v125
    %v560 = vunpack.c.l.b16 %v126
    %v561 = vunpack.c.h.b16 %v126
    %v562 = vunpack.c.l.b16 %v127
    %v563 = vunpack.c.h.b16 %v127
    %v564 = vunpack.c.l.b16 %v128
    %v565 = vunpack.c.h.b16 %v128
    %v566 = vunpack.c.l.b16 %v129
    %v567 = vunpack.c.h.b16 %v129
    %v568 = vunpack.c.l.b16 %v130
    %v569 = vunpack.c.h.b16 %v130
    %v570 = vunpack.c.l.b16 %v131
    %v571 = vunpack.c.h.b16 %v131
    %v572 = vunpack.c.l.b16 %v132
    %v573 = vunpack.c.h.b16 %v132
    %v574 = vunpack.c.l.b16 %v133
    %v575 = vunpack.c.h.b16 %v133
    %v576 = vunpack.c.l.b16 %v134
    %v577 = vunpack.c.h.b16 %v134
    %v578 = vunpack.c.l.b16 %v135
    %v579 = vunpack.c.h.b16 %v135
    %v580 = vunpack.c.l.b16 %v136
    %v581 = vunpack.c.h.b16 %v136
    %v582 = vunpack.c.l.b16 %v137
    %v583 = vunpack.c.h.b16 %v137
    %v584 = vunpack.c.l.b16 %v138
    %v585 = vunpack.c.h.b16 %v138
    %v586 = vunpack.c.l.b16 %v139
    %v587 = vunpack.c.h.b16 %v139
    %v588 = vunpack.c.l.b16 %v140
    %v589 = vunpack.c.h.b16 %v140
    %v590 = vunpack.c.l.b16 %v141
    %v591 = vunpack.c.h.b16 %v141
    %v592 = vunpack.c.l.b16 %v142
    %v593 = vunpack.c.h.b16 %v142
    %v594 = vunpack.c.l.b16 %v143
    %v595 = vunpack.c.h.b16 %v143
    %v596 = vunpack.c.l.b16 %v144
    %v597 = vunpack.c.h.b16 %v144
    %v598 = vunpack.c.l.b16 %v145
    %v599 = vunpack.c.h.b16 %v145
    %v600 = vunpack.c.l.b16 %v146
    %v601 = vunpack.c.h.b16 %v146
    %v602 = vunpack.c.l.b16 %v147
    %v603 = vunpack.c.h.b16 %v147
    %v604 = vunpack.c.l.b16 %v148
    %v605 = vunpack.c.h.b16 %v148
    %v606 = vunpack.c.l.b16 %v149
    %v607 = vunpack.c.h.b16 %v149
    %v608 = vunpack.c.l.b16 %v150
    %v609 = vunpack.c.h.b16 %v150
    %v610 = vunpack.c.l.b16 %v151
    %v611 = vunpack.c.h.b16 %v151
    %v612 = vunpack.c.l.b16 %v152
    %v613 = vunpack.c.h.b16 %v152
    %v614 = vunpack.c.l.b16 %v153
    %v615 = vunpack.c.h.b16 %v153
    %v616 = vunpack.c.l.b16 %v154
    %v617 = vunpack.c.h.b16 %v154
    %v618 = vunpack.c.l.b16 %v155
    %v619 = vunpack.c.h.b16 %v155
    %v620 = vunpack.c.l.b16 %v156
    %v621 = vunpack.c.h.b16 %v156
    %v622 = vunpack.c.l.b16 %v157
    %v623 = vunpack.c.h.b16 %v157
    %v624 = vunpack.c.l.b16 %v158
    %v625 = vunpack.c.h.b16 %v158
    %v626 = vunpack.c.l.b16 %v159
    %v627 = vunpack.c.h.b16 %v159
    %v628 = vunpack.c.l.b16 %v160
    %v629 = vunpack.c.h.b16 %v160
    %v630 = vunpack.c.l.b16 %v161
    %v631 = vunpack.c.h.b16 %v161
    %v632 = vunpack.c.l.b16 %v162
    %v633 = vunpack.c.h.b16 %v162
    %v634 = vunpack.c.l.b16 %v163
    %v635 = vunpack.c.h.b16 %v163
    %v636 = vunpack.c.l.b16 %v164
    %v637 = vunpack.c.h.b16 %v164
    %v638 = vunpack.c.l.b16 %v165
    %v639 = vunpack.c.h.b16 %v165
    %v640 = vunpack.c.l.b16 %v166
    %v641 = vunpack.c.h.b16 %v166
    %v642 = vunpack.c.l.b16 %v167
    %v643 = vunpack.c.h.b16 %v167
    %v644 = vunpack.c.l.b16 %v168
    %v645 = vunpack.c.h.b16 %v168
    %v646 = vunpack.c.l.b16 %v169
    %v647 = vunpack.c.h.b16 %v169
    %v648 = vunpack.c.l.b16 %v170
    %v649 = vunpack.c.h.b16 %v170
    %v650 = vunpack.c.l.b16 %v171
    %v651 = vunpack.c.h.b16 %v171
    %v652 = vunpack.c.l.b16 %v172
    %v653 = vunpack.c.h.b16 %v172
    %v654 = vunpack.c.l.b16 %v173
    %v655 = vunpack.c.h.b16 %v173
    %v656 = vunpack.c.l.b16 %v174
    %v657 = vunpack.c.h.b16 %v174
    %v658 = vunpack.c.l.b16 %v175
    %v659 = vunpack.c.h.b16 %v175
    %v660 = vunpack.c.l.b16 %v176
    %v661 = vunpack.c.h.b16 %v176
    %v662 = vunpack.c.l.b16 %v177
    %v663 = vunpack.c.h.b16 %v177
    %v664 = vunpack.c.l.b16 %v178
    %v665 = vunpack.c.h.b16 %v178
    %v666 = vunpack.c.l.b16 %v179
    %v667 = vunpack.c.h.b16 %v179
    %v668 = vunpack.c.l.b16 %v180
    %v669 = vunpack.c.h.b16 %v180
    %v670 = vunpack.c.l.b16 %v181
    %v671 = vunpack.c.h.b16 %v181
    %v672 = vunpack.c.l.b16 %v182
    %v673 = vunpack.c.h.b16 %v182
    %v674 = vunpack.c.l.b16 %v183
    %v675 = vunpack.c.h.b16 %v183
    %v676 = vunpack.c.l.b16 %v184
    %v677 = vunpack.c.h.b16 %v184
    %v678 = vunpack.c.l.b16 %v185
    %v679 = vunpack.c.h.b16 %v185
    %v680 = vunpack.c.l.b16 %v186
    %v681 = vunpack.c.h.b16 %v186
    %v682 = vunpack.c.l.b16 %v187
    %v683 = vunpack.c.h.b16 %v187
    %v684 = vunpack.c.l.b16 %v188
    %v685 = vunpack.c.h.b16 %v188
    %v686 = vunpack.c.l.b16 %v189
    %v687 = vunpack.c.h.b16 %v189
    %v688 = vunpack.c.l.b16 %v190
    %v689 = vunpack.c.h.b16 %v190
    %v690 = vunpack.c.l.b16 %v191
    %v691 = vunpack.c.h.b16 %v191
    %v692 = vunpack.c.l.b16 %v192
    %v693 = vunpack.c.h.b16 %v192
    %v694 = vunpack.c.l.b16 %v193
    %v695 = vunpack.c.h.b16 %v193
    %v696 = vunpack.c.l.b16 %v194
    %v697 = vunpack.c.h.b16 %v194
    %v698 = vunpack.c.l.b16 %v195
    %v699 = vunpack.c.h.b16 %v195
    %v700 = vunpack.c.l.b16 %v196
    %v701 = vunpack.c.h.b16 %v196
    %v702 = vunpack.c.l.b16 %v197
    %v703 = vunpack.c.h.b16 %v197
    %v704 = vunpack.c.l.b16 %v198
    %v705 = vunpack.c.h.b16 %v198
    %v706 = vunpack.c.l.b16 %v199
    %v707 = vunpack.c.h.b16 %v199
    %v708 = vunpack.c.l.b16 %v200
    %v709 = vunpack.c.h.b16 %v200
    %v710 = vunpack.c.l.b16 %v201
    %v711 = vunpack.c.h.b16 %v201
    %v712 = vunpack.c.l.b16 %v202
    %v713 = vunpack.c.h.b16 %v202
    %v714 = vunpack.c.l.b16 %v203
    %v715 = vunpack.c.h.b16 %v203
    %v716 = vunpack.c.l.b16 %v204
    %v717 = vunpack.c.h.b16 %v204
    %v718 = vunpack.c.l.b16 %v205
    %v719 = vunpack.c.h.b16 %v205
    %v720 = vunpack.c.l.b16 %v206
    %v721 = vunpack.c.h.b16 %v206
    %v722 = vunpack.c.l.b16 %v207
    %v723 = vunpack.c.h.b16 %v207
    %v724 = vunpack.c.l.b16 %v208
    %v725 = vunpack.c.h.b16 %v208
    %v726 = vunpack.c.l.b16 %v209
    %v727 = vunpack.c.h.b16 %v209
    %v728 = vunpack.c.l.b16 %v210
    %v729 = vunpack.c.h.b16 %v210
    %v730 = vunpack.c.l.b16 %v211
    %v731 = vunpack.c.h.b16 %v211
    %v732 = vunpack.c.l.b16 %v212
    %v733 = vunpack.c.h.b16 %v212
    %v734 = vunpack.c.l.b16 %v213
    %v735 = vunpack.c.h.b16 %v213
    %v736 = vunpack.c.l.b16 %v214
    %v737 = vunpack.c.h.b16 %v214
    %v738 = vunpack.c.l.b16 %v215
    %v739 = vunpack.c.h.b16 %v215
    %v740 = vunpack.c.l.b16 %v216
    %v741 = vunpack.c.h.b16 %v216
    %v742 = vunpack.c.l.b16 %v217
    %v743 = vunpack.c.h.b16 %v217
    %v744 = vunpack.c.l.b16 %v218
    %v745 = vunpack.c.h.b16 %v218
    %v746 = vunpack.c.l.b16 %v219
    %v747 = vunpack.c.h.b16 %v219
    %v748 = vunpack.c.l.b16 %v220
    %v749 = vunpack.c.h.b16 %v220
    %v750 = vunpack.c.l.b16 %v221
    %v751 = vunpack.c.h.b16 %v221
    %v752 = vunpack.c.l.b16 %v222
    %v753 = vunpack.c.h.b16 %v222
    %v754 = vunpack.c.l.b16 %v223
    %v755 = vunpack.c.h.b16 %v223
    %v756 = vunpack.c.l.b16 %v224
    %v757 = vunpack.c.h.b16 %v224
    %v758 = vunpack.c.l.b16 %v225
    %v759 = vunpack.c.h.b16 %v225
    %v760 = vunpack.c.l.b16 %v226
    %v761 = vunpack.c.h.b16 %v226
    %v762 = vunpack.c.l.b16 %v227
    %v763 = vunpack.c.h.b16 %v227
    %v764 = vunpack.c.l.b16 %v228
    %v765 = vunpack.c.h.b16 %v228
    %v766 = vunpack.c.l.b16 %v229
    %v767 = vunpack.c.h.b16 %v229
    %v768 = vunpack.c.l.b16 %v230
    %v769 = vunpack.c.h.b16 %v230
    %v770 = vunpack.c.l.b16 %v231
    %v771 = vunpack.c.h.b16 %v231
    %v772 = vunpack.c.l.b16 %v232
    %v773 = vunpack.c.h.b16 %v232
    %v774 = vunpack.c.l.b16 %v233
    %v775 = vunpack.c.h.b16 %v233
    %v776 = vunpack.c.l.b16 %v234
    %v777 = vunpack.c.h.b16 %v234
    %v778 = vunpack.c.l.b16 %v235
    %v779 = vunpack.c.h.b16 %v235
    %v780 = vunpack.c.l.b16 %v236
    %v781 = vunpack.c.h.b16 %v236
    %v782 = vunpack.c.l.b16 %v237
    %v783 = vunpack.c.h.b16 %v237
    %v784 = vunpack.c.l.b16 %v238
    %v785 = vunpack.c.h.b16 %v238
    %v786 = vunpack.c.l.b16 %v239
    %v787 = vunpack.c.h.b16 %v239
    %v788 = vunpack.c.l.b16 %v240
    %v789 = vunpack.c.h.b16 %v240
    %v790 = vunpack.c.l.b16 %v241
    %v791 = vunpack.c.h.b16 %v241
    %v792 = vunpack.c.l.b16 %v242
    %v793 = vunpack.c.h.b16 %v242
    %v794 = vunpack.c.l.b16 %v243
    %v795 = vunpack.c.h.b16 %v243
    %v796 = vunpack.c.l.b16 %v244
    %v797 = vunpack.c.h.b16 %v244
    %v798 = vunpack.c.l.b16 %v245
    %v799 = vunpack.c.h.b16 %v245
    %v800 = vunpack.c.l.b16 %v246
    %v801 = vunpack.c.h.b16 %v246
    %v802 = vunpack.c.l.b16 %v247
    %v803 = vunpack.c.h.b16 %v247
    %v804 = vunpack.c.l.b16 %v248
    %v805 = vunpack.c.h.b16 %v248
    %v806 = vunpack.c.l.b16 %v249
    %v807 = vunpack.c.h.b16 %v249
    %v808 = vunpack.c.l.b16 %v250
    %v809 = vunpack.c.h.b16 %v250
    %v810 = vunpack.c.l.b16 %v251
    %v811 = vunpack.c.h.b16 %v251
    %v812 = vunpack.c.l.b16 %v252
    %v813 = vunpack.c.h.b16 %v252
    %v814 = vunpack.c.l.b16 %v253
    %v815 = vunpack.c.h.b16 %v253
    %v816 = vunpack.c.l.b16 %v254
    %v817 = vunpack.c.h.b16 %v254
    %v818 = vunpack.c.l.b16 %v255
    %v819 = vunpack.c.h.b16 %v255
    %v820 = vunpack.c.l.b16 %v256
    %v821 = vunpack.c.h.b16 %v256
    %v822 = vunpack.c.l.b16 %v257
    %v823 = vunpack.c.h.b16 %v257
    %v824 = vunpack.c.l.b16 %v258
    %v825 = vunpack.c.h.b16 %v258
    %v826 = vunpack.c.l.b16 %v259
    %v827 = vunpack.c.h.b16 %v259
    %v828 = vunpack.c.l.b16 %v260
    %v829 = vunpack.c.h.b16 %v260
    %v830 = vunpack.c.l.b16 %v261
    %v831 = vunpack.c.h.b16 %v261
    %v832 = vunpack.c.l.b16 %v262
    %v833 = vunpack.c.h.b16 %v262
    %v834 = vunpack.c.l.b16 %v263
    %v835 = vunpack.c.h.b16 %v263
    %v836 = vunpack.c.l.b16 %v264
    %v837 = vunpack.c.h.b16 %v264
    %v838 = vunpack.c.l.b16 %v265
    %v839 = vunpack.c.h.b16 %v265
    %v840 = vunpack.c.l.b16 %v266
    %v841 = vunpack.c.h.b16 %v266
    %v842 = vunpack.c.l.b16 %v267
    %v843 = vunpack.c.h.b16 %v267
    %v844 = vunpack.c.l.b16 %v268
    %v845 = vunpack.c.h.b16 %v268
    %v846 = vunpack.c.l.b16 %v269
    %v847 = vunpack.c.h.b16 %v269
    %v848 = vunpack.c.l.b16 %v270
    %v849 = vunpack.c.h.b16 %v270
    %v850 = vunpack.c.l.b16 %v271
    %v851 = vunpack.c.h.b16 %v271
    %v852 = vunpack.c.l.b16 %v272
    %v853 = vunpack.c.h.b16 %v272
    %v854 = vunpack.c.l.b16 %v273
    %v855 = vunpack.c.h.b16 %v273
    %v856 = vunpack.c.l.b16 %v274
    %v857 = vunpack.c.h.b16 %v274
    %v858 = vunpack.c.l.b16 %v275
    %v859 = vunpack.c.h.b16 %v275
    %v860 = vunpack.c.l.b16 %v276
    %v861 = vunpack.c.h.b16 %v276
    %v862 = vunpack.c.l.b16 %v277
    %v863 = vunpack.c.h.b16 %v277
    %v864 = vunpack.c.l.b16 %v278
    %v865 = vunpack.c.h.b16 %v278
    %v866 = vunpack.c.l.b16 %v279
    %v867 = vunpack.c.h.b16 %v279
    %v868 = vunpack.c.l.b16 %v280
    %v869 = vunpack.c.h.b16 %v280
    %v870 = vunpack.c.l.b16 %v281
    %v871 = vunpack.c.h.b16 %v281
    %v872 = vunpack.c.l.b16 %v282
    %v873 = vunpack.c.h.b16 %v282
    %v874 = vunpack.c.l.b16 %v283
    %v875 = vunpack.c.h.b16 %v283
    %v876 = vunpack.c.l.b16 %v284
    %v877 = vunpack.c.h.b16 %v284
    %v878 = vunpack.c.l.b16 %v285
    %v879 = vunpack.c.h.b16 %v285
    %v880 = vunpack.c.l.b16 %v286
    %v881 = vunpack.c.h.b16 %v286
    %v882 = vunpack.c.l.b16 %v287
    %v883 = vunpack.c.h.b16 %v287
    %v884 = vunpack.c.l.b16 %v288
    %v885 = vunpack.c.h.b16 %v288
    %v886 = vunpack.c.l.b16 %v289
    %v887 = vunpack.c.h.b16 %v289
    %v888 = vunpack.c.l.b16 %v290
    %v889 = vunpack.c.h.b16 %v290
    %v890 = vunpack.c.l.b16 %v291
    %v891 = vunpack.c.h.b16 %v291
    %v892 = vunpack.c.l.b16 %v292
    %v893 = vunpack.c.h.b16 %v292
    %v894 = vunpack.c.l.b16 %v293
    %v895 = vunpack.c.h.b16 %v293
    %v896 = vunpack.c.l.b16 %v294
    %v897 = vunpack.c.h.b16 %v294
    %v898 = vunpack.c.l.b16 %v295
    %v899 = vunpack.c.h.b16 %v295
    %v900 = vunpack.c.l.b16 %v296
    %v901 = vunpack.c.h.b16 %v296
    %v902 = vunpack.c.l.b16 %v297
    %v903 = vunpack.c.h.b16 %v297
    %v904 = vunpack.c.l.b16 %v298
    %v905 = vunpack.c.h.b16 %v298
    %v906 = vunpack.c.l.b16 %v299
    %v907 = vunpack.c.h.b16 %v299
    %v908 = vunpack.c.l.b16 %v300
    %v909 = vunpack.c.h.b16 %v300
    %v910 = vunpack.c.l.b16 %v301
    %v911 = vunpack.c.h.b16 %v301
    %v912 = vpack.c.b16 %v524, %v520
    %v913 = vpack.c.b16 %v525, %v521
    %v914 = vpack.c.b16 %v526, %v522
    %v915 = vpack.c.b16 %v527, %v523
    %v916 = vpack.c.b16 %v532, %v528
    %v917 = vpack.c.b16 %v533, %v529
    %v918 = vpack.c.b16 %v534, %v530
    %v919 = vpack.c.b16 %v535, %v531
    %v920 = vpack.c.b16 %v540, %v536
    %v921 = vpack.c.b16 %v541, %v537
    %v922 = vpack.c.b16 %v542, %v538
    %v923 = vpack.c.b16 %v543, %v539
    %v924 = vpack.c.b16 %v548, %v544
    %v925 = vpack.c.b16 %v549, %v545
    %v926 = vpack.c.b16 %v550, %v546
    %v927 = vpack.c.b16 %v551, %v547
    %v928 = vpack.c.b16 %v556, %v552
    %v929 = vpack.c.b16 %v557, %v553
    %v930 = vpack.c.b16 %v558, %v554
    %v931 = vpack.c.b16 %v559, %v555
    %v932 = vpack.c.b16 %v564, %v560
    %v933 = vpack.c.b16 %v565, %v561
    %v934 = vpack.c.b16 %v566, %v562
    %v935 = vpack.c.b16 %v567, %v563
    %v936 = vpack.c.b16 %v572, %v568
    %v937 = vpack.c.b16 %v573, %v569
    %v938 = vpack.c.b16 %v574, %v570
    %v939 = vpack.c.b16 %v575, %v571
    %v940 = vpack.c.b16 %v580, %v576
    %v941 = vpack.c.b16 %v581, %v577
    %v942 = vpack.c.b16 %v582, %v578
    %v943 = vpack.c.b16 %v583, %v579
    %v944 = vpack.c.b16 %v588, %v584
    %v945 = vpack.c.b16 %v589, %v585
    %v946 = vpack.c.b16 %v590, %v586
    %v947 = vpack.c.b16 %v591, %v587
    %v948 = vpack.c.b16 %v596, %v592
    %v949 = vpack.c.b16 %v597, %v593
    %v950 = vpack.c.b16 %v598, %v594
    %v951 = vpack.c.b16 %v599, %v595
    %v952 = vpack.c.b16 %v604, %v600
    %v953 = vpack.c.b16 %v605, %v601
    %v954 = vpack.c.b16 %v606, %v602
    %v955 = vpack.c.b16 %v607, %v603
    %v956 = vpack.c.b16 %v612, %v608
    %v957 = vpack.c.b16 %v613, %v609
    %v958 = vpack.c.b16 %v614, %v610
    %v959 = vpack.c.b16 %v615, %v611
    %v960 = vpack.c.b16 %v620, %v616
    %v961 = vpack.c.b16 %v621, %v617
    %v962 = vpack.c.b16 %v622, %v618
    %v963 = vpack.c.b16 %v623, %v619
    %v964 = vpack.c.b16 %v628, %v624
    %v965 = vpack.c.b16 %v629, %v625
    %v966 = vpack.c.b16 %v630, %v626
    %v967 = vpack.c.b16 %v631, %v627
    %v968 = vpack.c.b16 %v636, %v632
    %v969 = vpack.c.b16 %v637, %v633
    %v970 = vpack.c.b16 %v638, %v634
    %v971 = vpack.c.b16 %v639, %v635
    %v972 = vpack.c.b16 %v644, %v640
    %v973 = vpack.c.b16 %v645, %v641
    %v974 = vpack.c.b16 %v646, %v642
    %v975 = vpack.c.b16 %v647, %v643
    %v976 = vpack.c.b16 %v652, %v648
    %v977 = vpack.c.b16 %v653, %v649
    %v978 = vpack.c.b16 %v654, %v650
    %v979 = vpack.c.b16 %v655, %v651
    %v980 = vpack.c.b16 %v660, %v656
    %v981 = vpack.c.b16 %v661, %v657
    %v982 = vpack.c.b16 %v662, %v658
    %v983 = vpack.c.b16 %v663, %v659
    %v984 = vpack.c.b16 %v668, %v664
    %v985 = vpack.c.b16 %v669, %v665
    %v986 = vpack.c.b16 %v670, %v666
    %v987 = vpack.c.b16 %v671, %v667
    %v988 = vpack.c.b16 %v676, %v672
    %v989 = vpack.c.b16 %v677, %v673
    %v990 = vpack.c.b16 %v678, %v674
    %v991 = vpack.c.b16 %v679, %v675
    %v992 = vpack.c.b16 %v684, %v680
    %v993 = vpack.c.b16 %v685, %v681
    %v994 = vpack.c.b16 %v686, %v682
    %v995 = vpack.c.b16 %v687, %v683
    %v996 = vpack.c.b16 %v692, %v688
    %v997 = vpack.c.b16 %v693, %v689
    %v998 = vpack.c.b16 %v694, %v690
    %v999 = vpack.c.b16 %v695, %v691
    %v1000 = vpack.c.b16 %v700, %v696
    %v1001 = vpack.c.b16 %v701, %v697
    %v1002 = vpack.c.b16 %v702, %v698
    %v1003 = vpack.c.b16 %v703, %v699
    %v1004 = vpack.c.b16 %v708, %v704
    %v1005 = vpack.c.b16 %v709, %v705
    %v1006 = vpack.c.b16 %v710, %v706
    %v1007 = vpack.c.b16 %v711, %v707
    %v1008 = vpack.c.b16 %v716, %v712
    %v1009 = vpack.c.b16 %v717, %v713
    %v1010 = vpack.c.b16 %v718, %v714
    %v1011 = vpack.c.b16 %v719, %v715
    %v1012 = vpack.c.b16 %v724, %v720
    %v1013 = vpack.c.b16 %v725, %v721
    %v1014 = vpack.c.b16 %v726, %v722
    %v1015 = vpack.c.b16 %v727, %v723
    %v1016 = vpack.c.b16 %v732, %v728
    %v1017 = vpack.c.b16 %v733, %v729
    %v1018 = vpack.c.b16 %v734, %v730
    %v1019 = vpack.c.b16 %v735, %v731
    %v1020 = vpack.c.b16 %v740, %v736
    %v1021 = vpack.c.b16 %v741, %v737
    %v1022 = vpack.c.b16 %v742, %v738
    %v1023 = vpack.c.b16 %v743, %v739
    %v1024 = vpack.c.b16 %v748, %v744
    %v1025 = vpack.c.b16 %v749, %v745
    %v1026 = vpack.c.b16 %v750, %v746
    %v1027 = vpack.c.b16 %v751, %v747
    %v1028 = vpack.c.b16 %v756, %v752
    %v1029 = vpack.c.b16 %v757, %v753
    %v1030 = vpack.c.b16 %v758, %v754
    %v1031 = vpack.c.b16 %v759, %v755
    %v1032 = vpack.c.b16 %v764, %v760
    %v1033 = vpack.c.b16 %v765, %v761
    %v1034 = vpack.c.b16 %v766, %v762
    %v1035 = vpack.c.b16 %v767, %v763
    %v1036 = vpack.c.b16 %v772, %v768
    %v1037 = vpack.c.b16 %v773, %v769
    %v1038 = vpack.c.b16 %v774, %v770
    %v1039 = vpack.c.b16 %v775, %v771
    %v1040 = vpack.c.b16 %v780, %v776
    %v1041 = vpack.c.b16 %v781, %v777
    %v1042 = vpack.c.b16 %v782, %v778
    %v1043 = vpack.c.b16 %v783, %v779
    %v1044 = vpack.c.b16 %v788, %v784
    %v1045 = vpack.c.b16 %v789, %v785
    %v1046 = vpack.c.b16 %v790, %v786
    %v1047 = vpack.c.b16 %v791, %v787
    %v1048 = vpack.c.b16 %v796, %v792
    %v1049 = vpack.c.b16 %v797, %v793
    %v1050 = vpack.c.b16 %v798, %v794
    %v1051 = vpack.c.b16 %v799, %v795
    %v1052 = vpack.c.b16 %v804, %v800
    %v1053 = vpack.c.b16 %v805, %v801
    %v1054 = vpack.c.b16 %v806, %v802
    %v1055 = vpack.c.b16 %v807, %v803
    %v1056 = vpack.c.b16 %v812, %v808
    %v1057 = vpack.c.b16 %v813, %v809
    %v1058 = vpack.c.b16 %v814, %v810
    %v1059 = vpack.c.b16 %v815, %v811
    %v1060 = vpack.c.b16 %v820, %v816
    %v1061 = vpack.c.b16 %v821, %v817
    %v1062 = vpack.c.b16 %v822, %v818
    %v1063 = vpack.c.b16 %v823, %v819
    %v1064 = vpack.c.b16 %v828, %v824
    %v1065 = vpack.c.b16 %v829, %v825
    %v1066 = vpack.c.b16 %v830, %v826
    %v1067 = vpack.c.b16 %v831, %v827
    %v1068 = vpack.c.b16 %v836, %v832
    %v1069 = vpack.c.b16 %v837, %v833
    %v1070 = vpack.c.b16 %v838, %v834
    %v1071 = vpack.c.b16 %v839, %v835
    %v1072 = vpack.c.b16 %v844, %v840
    %v1073 = vpack.c.b16 %v845, %v841
    %v1074 = vpack.c.b16 %v846, %v842
    %v1075 = vpack.c.b16 %v847, %v843
    %v1076 = vpack.c.b16 %v852, %v848
    %v1077 = vpack.c.b16 %v853, %v849
    %v1078 = vpack.c.b16 %v854, %v850
    %v1079 = vpack.c.b16 %v855, %v851
    %v1080 = vpack.c.b16 %v860, %v856
    %v1081 = vpack.c.b16 %v861, %v857
    %v1082 = vpack.c.b16 %v862, %v858
    %v1083 = vpack.c.b16 %v863, %v859
    %v1084 = vpack.c.b16 %v868, %v864
    %v1085 = vpack.c.b16 %v869, %v865
    %v1086 = vpack.c.b16 %v870, %v866
    %v1087 = vpack.c.b16 %v871, %v867
    %v1088 = vpack.c.b16 %v876, %v872
    %v1089 = vpack.c.b16 %v877, %v873
    %v1090 = vpack.c.b16 %v878, %v874
    %v1091 = vpack.c.b16 %v879, %v875
    %v1092 = vpack.c.b16 %v884, %v880
    %v1093 = vpack.c.b16 %v885, %v881
    %v1094 = vpack.c.b16 %v886, %v882
    %v1095 = vpack.c.b16 %v887, %v883
    %v1096 = vpack.c.b16 %v892, %v888
    %v1097 = vpack.c.b16 %v893, %v889
    %v1098 = vpack.c.b16 %v894, %v890
    %v1099 = vpack.c.b16 %v895, %v891
    %v1100 = vpack.c.b16 %v900, %v896
    %v1101 = vpack.c.b16 %v901, %v897
    %v1102 = vpack.c.b16 %v902, %v898
    %v1103 = vpack.c.b16 %v903, %v899
    %v1104 = vpack.c.b16 %v908, %v904
    %v1105 = vpack.c.b16 %v909, %v905
    %v1106 = vpack.c.b16 %v910, %v906
    %v1107 = vpack.c.b16 %v911, %v907
    %vm1304 = vcmask 130048
    %v1306 = vsel %vm1304, %v105, 0
    %1308 = vmatprep.subr.bf16.mxu0 %v941
    %1309 = vmatpush1.bf16.msra.mxu0 %v940
    %1310 = vmatprep.subr.bf16.mxu0 %v937
    %1311 = vmatpush1.bf16.msra.mxu0 %v936
    %1312 = vmatprep.subr.bf16.mxu0 %v933
    %1313 = vmatpush1.bf16.msra.mxu0 %v932
    %1314 = vmatprep.subr.bf16.mxu0 %v929
    %1315 = vmatpush1.bf16.msra.mxu0 %v928
    %1316 = vmatprep.subr.bf16.mxu0 %v925
    %1317 = vmatpush1.bf16.msra.mxu0 %v924
    %1318 = vmatprep.subr.bf16.mxu0 %v921
    %1319 = vmatpush1.bf16.msra.mxu0 %v920
    %1320 = vmatprep.subr.bf16.mxu0 %v917
    %1321 = vmatpush1.bf16.msra.mxu0 %v916
    %1322 = vmatprep.subr.bf16.mxu0 %v913
    %1323 = vmatpush1.bf16.msra.mxu0 %v912
    %1324 = vmatprep.subr.bf16.mxu0 %v973
    %1325 = vmatpush2.bf16.msra.mxu0 %v972
    %1326 = vmatprep.subr.bf16.mxu0 %v969
    %1327 = vmatpush2.bf16.msra.mxu0 %v968
    %1328 = vmatprep.subr.bf16.mxu0 %v965
    %1329 = vmatpush2.bf16.msra.mxu0 %v964
    %1330 = vmatprep.subr.bf16.mxu0 %v961
    %1331 = vmatpush2.bf16.msra.mxu0 %v960
    %1332 = vmatprep.subr.bf16.mxu0 %v957
    %1333 = vmatpush2.bf16.msra.mxu0 %v956
    %1334 = vmatprep.subr.bf16.mxu0 %v953
    %1335 = vmatpush2.bf16.msra.mxu0 %v952
    %1336 = vmatprep.subr.bf16.mxu0 %v949
    %1337 = vmatpush2.bf16.msra.mxu0 %v948
    %1338 = vmatprep.subr.bf16.mxu0 %v945
    %1339 = vmatpush2.bf16.msra.mxu0 %v944
    %1340 = vmatprep.mubr.bf16.mxu0 %v100
    %1341 = vmatmul.mubr.bf16.gmra.mxu0 %v99
    %v1342 = vpop.f32.mrf.mxu0
    %v1343 = vadd.f32 %v307, %v1342
    %v1344 = vpop.f32.mrf.mxu0
    %v1345 = vadd.f32 %v311, %v1344
    %v1346 = vpop.f32.mrf.mxu0
    %v1347 = vpop.f32.mrf.mxu0
    %1348 = vdwg.mxu0
    %1349 = vmatprep.subr.bf16.mxu0 %v1005
    %1350 = vmatpush1.bf16.msra.mxu0 %v1004
    %1351 = vmatprep.subr.bf16.mxu0 %v1001
    %1352 = vmatpush1.bf16.msra.mxu0 %v1000
    %1353 = vmatprep.subr.bf16.mxu0 %v997
    %1354 = vmatpush1.bf16.msra.mxu0 %v996
    %1355 = vmatprep.subr.bf16.mxu0 %v993
    %1356 = vmatpush1.bf16.msra.mxu0 %v992
    %1357 = vmatprep.subr.bf16.mxu0 %v989
    %1358 = vmatpush1.bf16.msra.mxu0 %v988
    %1359 = vmatprep.subr.bf16.mxu0 %v985
    %1360 = vmatpush1.bf16.msra.mxu0 %v984
    %1361 = vmatprep.subr.bf16.mxu0 %v981
    %1362 = vmatpush1.bf16.msra.mxu0 %v980
    %1363 = vmatprep.subr.bf16.mxu0 %v977
    %1364 = vmatpush1.bf16.msra.mxu0 %v976
    %1365 = vmatprep.subr.bf16.mxu0 %v1037
    %1366 = vmatpush2.bf16.msra.mxu0 %v1036
    %1367 = vmatprep.subr.bf16.mxu0 %v1033
    %1368 = vmatpush2.bf16.msra.mxu0 %v1032
    %1369 = vmatprep.subr.bf16.mxu0 %v1029
    %1370 = vmatpush2.bf16.msra.mxu0 %v1028
    %1371 = vmatprep.subr.bf16.mxu0 %v1025
    %1372 = vmatpush2.bf16.msra.mxu0 %v1024
    %1373 = vmatprep.subr.bf16.mxu0 %v1021
    %1374 = vmatpush2.bf16.msra.mxu0 %v1020
    %1375 = vmatprep.subr.bf16.mxu0 %v1017
    %1376 = vmatpush2.bf16.msra.mxu0 %v1016
    %1377 = vmatprep.subr.bf16.mxu0 %v1013
    %1378 = vmatpush2.bf16.msra.mxu0 %v1012
    %1379 = vmatprep.subr.bf16.mxu0 %v1009
    %1380 = vmatpush2.bf16.msra.mxu0 %v1008
    %1381 = vmatprep.mubr.bf16.mxu0 %v102
    %1382 = vmatmul.mubr.bf16.gmra.mxu0 %v101
    %v1383 = vpop.f32.mrf.mxu0
    %v1384 = vadd.f32 %v1343, %v1383
    %v1385 = vpop.f32.mrf.mxu0
    %v1386 = vadd.f32 %v1345, %v1385
    %v1387 = vpop.f32.mrf.mxu0
    %v1388 = vpop.f32.mrf.mxu0
    %1389 = vdwg.mxu0
    %1390 = vmatprep.subr.bf16.mxu0 %v1069
    %1391 = vmatpush1.bf16.msra.mxu0 %v1068
    %1392 = vmatprep.subr.bf16.mxu0 %v1065
    %1393 = vmatpush1.bf16.msra.mxu0 %v1064
    %1394 = vmatprep.subr.bf16.mxu0 %v1061
    %1395 = vmatpush1.bf16.msra.mxu0 %v1060
    %1396 = vmatprep.subr.bf16.mxu0 %v1057
    %1397 = vmatpush1.bf16.msra.mxu0 %v1056
    %1398 = vmatprep.subr.bf16.mxu0 %v1053
    %1399 = vmatpush1.bf16.msra.mxu0 %v1052
    %1400 = vmatprep.subr.bf16.mxu0 %v1049
    %1401 = vmatpush1.bf16.msra.mxu0 %v1048
    %1402 = vmatprep.subr.bf16.mxu0 %v1045
    %1403 = vmatpush1.bf16.msra.mxu0 %v1044
    %1404 = vmatprep.subr.bf16.mxu0 %v1041
    %1405 = vmatpush1.bf16.msra.mxu0 %v1040
    %1406 = vmatprep.subr.bf16.mxu0 %v1101
    %1407 = vmatpush2.bf16.msra.mxu0 %v1100
    %1408 = vmatprep.subr.bf16.mxu0 %v1097
    %1409 = vmatpush2.bf16.msra.mxu0 %v1096
    %1410 = vmatprep.subr.bf16.mxu0 %v1093
    %1411 = vmatpush2.bf16.msra.mxu0 %v1092
    %1412 = vmatprep.subr.bf16.mxu0 %v1089
    %1413 = vmatpush2.bf16.msra.mxu0 %v1088
    %1414 = vmatprep.subr.bf16.mxu0 %v1085
    %1415 = vmatpush2.bf16.msra.mxu0 %v1084
    %1416 = vmatprep.subr.bf16.mxu0 %v1081
    %1417 = vmatpush2.bf16.msra.mxu0 %v1080
    %1418 = vmatprep.subr.bf16.mxu0 %v1077
    %1419 = vmatpush2.bf16.msra.mxu0 %v1076
    %1420 = vmatprep.subr.bf16.mxu0 %v1073
    %1421 = vmatpush2.bf16.msra.mxu0 %v1072
    %1422 = vmatprep.mubr.bf16.mxu0 %v104
    %1423 = vmatmul.mubr.bf16.gmra.mxu0 %v103
    %v1424 = vpop.f32.mrf.mxu0
    %v1425 = vadd.f32 %v1384, %v1424
    %v1426 = vpop.f32.mrf.mxu0
    %v1427 = vadd.f32 %v1386, %v1426
    %v1428 = vpop.f32.mrf.mxu0
    %v1429 = vpop.f32.mrf.mxu0
    %1430 = vdwg.mxu0
    %1431 = vmatprep.subr.bf16.mxu0 0
    %1432 = vmatpush1.bf16.msra.mxu0 0
    %1433 = vmatprep.subr.bf16.mxu0 0
    %1434 = vmatpush1.bf16.msra.mxu0 0
    %1435 = vmatprep.subr.bf16.mxu0 0
    %1436 = vmatpush1.bf16.msra.mxu0 0
    %1437 = vmatprep.subr.bf16.mxu0 0
    %1438 = vmatpush1.bf16.msra.mxu0 0
    %1439 = vmatprep.subr.bf16.mxu0 0
    %1440 = vmatpush1.bf16.msra.mxu0 0
    %1441 = vmatprep.subr.bf16.mxu0 0
    %1442 = vmatpush1.bf16.msra.mxu0 0
    %1443 = vmatprep.subr.bf16.mxu0 0
    %1444 = vmatpush1.bf16.msra.mxu0 0
    %1445 = vmatprep.subr.bf16.mxu0 %v1105
    %1446 = vmatpush1.bf16.msra.mxu0 %v1104
    %1447 = vmatprep.subr.bf16.mxu0 0
    %1448 = vmatpush2.bf16.msra.mxu0 0
    %1449 = vmatprep.subr.bf16.mxu0 0
    %1450 = vmatpush2.bf16.msra.mxu0 0
    %1451 = vmatprep.subr.bf16.mxu0 0
    %1452 = vmatpush2.bf16.msra.mxu0 0
    %1453 = vmatprep.subr.bf16.mxu0 0
    %1454 = vmatpush2.bf16.msra.mxu0 0
    %1455 = vmatprep.subr.bf16.mxu0 0
    %1456 = vmatpush2.bf16.msra.mxu0 0
    %1457 = vmatprep.subr.bf16.mxu0 0
    %1458 = vmatpush2.bf16.msra.mxu0 0
    %1459 = vmatprep.subr.bf16.mxu0 0
    %1460 = vmatpush2.bf16.msra.mxu0 0
    %1461 = vmatprep.subr.bf16.mxu0 0
    %1462 = vmatpush2.bf16.msra.mxu0 0
    %1463 = vmatprep.mubr.bf16.mxu0 0
    %1464 = vmatmul.mubr.bf16.gmra.mxu0 %v1306
    %v1465 = vpop.f32.mrf.mxu0
    %v1466 = vadd.f32 %v1425, %v1465
    %v1467 = vpop.f32.mrf.mxu0
    %v1468 = vadd.f32 %v1427, %v1467
    %v1469 = vpop.f32.mrf.mxu0
    %v1470 = vpop.f32.mrf.mxu0
    %1471 = vdwg.mxu0
    %1472 = vmatprep.subr.bf16.mxu0 %v943
    %1473 = vmatpush1.bf16.msra.mxu0 %v942
    %1474 = vmatprep.subr.bf16.mxu0 %v939
    %1475 = vmatpush1.bf16.msra.mxu0 %v938
    %1476 = vmatprep.subr.bf16.mxu0 %v935
    %1477 = vmatpush1.bf16.msra.mxu0 %v934
    %1478 = vmatprep.subr.bf16.mxu0 %v931
    %1479 = vmatpush1.bf16.msra.mxu0 %v930
    %1480 = vmatprep.subr.bf16.mxu0 %v927
    %1481 = vmatpush1.bf16.msra.mxu0 %v926
    %1482 = vmatprep.subr.bf16.mxu0 %v923
    %1483 = vmatpush1.bf16.msra.mxu0 %v922
    %1484 = vmatprep.subr.bf16.mxu0 %v919
    %1485 = vmatpush1.bf16.msra.mxu0 %v918
    %1486 = vmatprep.subr.bf16.mxu0 %v915
    %1487 = vmatpush1.bf16.msra.mxu0 %v914
    %1488 = vmatprep.subr.bf16.mxu0 %v975
    %1489 = vmatpush2.bf16.msra.mxu0 %v974
    %1490 = vmatprep.subr.bf16.mxu0 %v971
    %1491 = vmatpush2.bf16.msra.mxu0 %v970
    %1492 = vmatprep.subr.bf16.mxu0 %v967
    %1493 = vmatpush2.bf16.msra.mxu0 %v966
    %1494 = vmatprep.subr.bf16.mxu0 %v963
    %1495 = vmatpush2.bf16.msra.mxu0 %v962
    %1496 = vmatprep.subr.bf16.mxu0 %v959
    %1497 = vmatpush2.bf16.msra.mxu0 %v958
    %1498 = vmatprep.subr.bf16.mxu0 %v955
    %1499 = vmatpush2.bf16.msra.mxu0 %v954
    %1500 = vmatprep.subr.bf16.mxu0 %v951
    %1501 = vmatpush2.bf16.msra.mxu0 %v950
    %1502 = vmatprep.subr.bf16.mxu0 %v947
    %1503 = vmatpush2.bf16.msra.mxu0 %v946
    %1504 = vmatprep.mubr.bf16.mxu0 %v100
    %1505 = vmatmul.mubr.bf16.gmra.mxu0 %v99
    %v1506 = vpop.f32.mrf.mxu0
    %v1507 = vadd.f32 %v315, %v1506
    %v1508 = vpop.f32.mrf.mxu0
    %v1509 = vadd.f32 %v319, %v1508
    %v1510 = vpop.f32.mrf.mxu0
    %v1511 = vpop.f32.mrf.mxu0
    %1512 = vdwg.mxu0
    %1513 = vmatprep.subr.bf16.mxu0 %v1007
    %1514 = vmatpush1.bf16.msra.mxu0 %v1006
    %1515 = vmatprep.subr.bf16.mxu0 %v1003
    %1516 = vmatpush1.bf16.msra.mxu0 %v1002
    %1517 = vmatprep.subr.bf16.mxu0 %v999
    %1518 = vmatpush1.bf16.msra.mxu0 %v998
    %1519 = vmatprep.subr.bf16.mxu0 %v995
    %1520 = vmatpush1.bf16.msra.mxu0 %v994
    %1521 = vmatprep.subr.bf16.mxu0 %v991
    %1522 = vmatpush1.bf16.msra.mxu0 %v990
    %1523 = vmatprep.subr.bf16.mxu0 %v987
    %1524 = vmatpush1.bf16.msra.mxu0 %v986
    %1525 = vmatprep.subr.bf16.mxu0 %v983
    %1526 = vmatpush1.bf16.msra.mxu0 %v982
    %1527 = vmatprep.subr.bf16.mxu0 %v979
    %1528 = vmatpush1.bf16.msra.mxu0 %v978
    %1529 = vmatprep.subr.bf16.mxu0 %v1039
    %1530 = vmatpush2.bf16.msra.mxu0 %v1038
    %1531 = vmatprep.subr.bf16.mxu0 %v1035
    %1532 = vmatpush2.bf16.msra.mxu0 %v1034
    %1533 = vmatprep.subr.bf16.mxu0 %v1031
    %1534 = vmatpush2.bf16.msra.mxu0 %v1030
    %1535 = vmatprep.subr.bf16.mxu0 %v1027
    %1536 = vmatpush2.bf16.msra.mxu0 %v1026
    %1537 = vmatprep.subr.bf16.mxu0 %v1023
    %1538 = vmatpush2.bf16.msra.mxu0 %v1022
    %1539 = vmatprep.subr.bf16.mxu0 %v1019
    %1540 = vmatpush2.bf16.msra.mxu0 %v1018
    %1541 = vmatprep.subr.bf16.mxu0 %v1015
    %1542 = vmatpush2.bf16.msra.mxu0 %v1014
    %1543 = vmatprep.subr.bf16.mxu0 %v1011
    %1544 = vmatpush2.bf16.msra.mxu0 %v1010
    %1545 = vmatprep.mubr.bf16.mxu0 %v102
    %1546 = vmatmul.mubr.bf16.gmra.mxu0 %v101
    %v1547 = vpop.f32.mrf.mxu0
    %v1548 = vadd.f32 %v1507, %v1547
    %v1549 = vpop.f32.mrf.mxu0
    %v1550 = vadd.f32 %v1509, %v1549
    %v1551 = vpop.f32.mrf.mxu0
    %v1552 = vpop.f32.mrf.mxu0
    %1553 = vdwg.mxu0
    %1554 = vmatprep.subr.bf16.mxu0 %v1071
    %1555 = vmatpush1.bf16.msra.mxu0 %v1070
    %1556 = vmatprep.subr.bf16.mxu0 %v1067
    %1557 = vmatpush1.bf16.msra.mxu0 %v1066
    %1558 = vmatprep.subr.bf16.mxu0 %v1063
    %1559 = vmatpush1.bf16.msra.mxu0 %v1062
    %1560 = vmatprep.subr.bf16.mxu0 %v1059
    %1561 = vmatpush1.bf16.msra.mxu0 %v1058
    %1562 = vmatprep.subr.bf16.mxu0 %v1055
    %1563 = vmatpush1.bf16.msra.mxu0 %v1054
    %1564 = vmatprep.subr.bf16.mxu0 %v1051
    %1565 = vmatpush1.bf16.msra.mxu0 %v1050
    %1566 = vmatprep.subr.bf16.mxu0 %v1047
    %1567 = vmatpush1.bf16.msra.mxu0 %v1046
    %1568 = vmatprep.subr.bf16.mxu0 %v1043
    %1569 = vmatpush1.bf16.msra.mxu0 %v1042
    %1570 = vmatprep.subr.bf16.mxu0 %v1103
    %1571 = vmatpush2.bf16.msra.mxu0 %v1102
    %1572 = vmatprep.subr.bf16.mxu0 %v1099
    %1573 = vmatpush2.bf16.msra.mxu0 %v1098
    %1574 = vmatprep.subr.bf16.mxu0 %v1095
    %1575 = vmatpush2.bf16.msra.mxu0 %v1094
    %1576 = vmatprep.subr.bf16.mxu0 %v1091
    %1577 = vmatpush2.bf16.msra.mxu0 %v1090
    %1578 = vmatprep.subr.bf16.mxu0 %v1087
    %1579 = vmatpush2.bf16.msra.mxu0 %v1086
    %1580 = vmatprep.subr.bf16.mxu0 %v1083
    %1581 = vmatpush2.bf16.msra.mxu0 %v1082
    %1582 = vmatprep.subr.bf16.mxu0 %v1079
    %1583 = vmatpush2.bf16.msra.mxu0 %v1078
    %1584 = vmatprep.subr.bf16.mxu0 %v1075
    %1585 = vmatpush2.bf16.msra.mxu0 %v1074
    %1586 = vmatprep.mubr.bf16.mxu0 %v104
    %1587 = vmatmul.mubr.bf16.gmra.mxu0 %v103
    %v1588 = vpop.f32.mrf.mxu0
    %v1589 = vadd.f32 %v1548, %v1588
    %v1590 = vpop.f32.mrf.mxu0
    %v1591 = vadd.f32 %v1550, %v1590
    %v1592 = vpop.f32.mrf.mxu0
    %v1593 = vpop.f32.mrf.mxu0
    %1594 = vdwg.mxu0
    %1595 = vmatprep.subr.bf16.mxu0 0
    %1596 = vmatpush1.bf16.msra.mxu0 0
    %1597 = vmatprep.subr.bf16.mxu0 0
    %1598 = vmatpush1.bf16.msra.mxu0 0
    %1599 = vmatprep.subr.bf16.mxu0 0
    %1600 = vmatpush1.bf16.msra.mxu0 0
    %1601 = vmatprep.subr.bf16.mxu0 0
    %1602 = vmatpush1.bf16.msra.mxu0 0
    %1603 = vmatprep.subr.bf16.mxu0 0
    %1604 = vmatpush1.bf16.msra.mxu0 0
    %1605 = vmatprep.subr.bf16.mxu0 0
    %1606 = vmatpush1.bf16.msra.mxu0 0
    %1607 = vmatprep.subr.bf16.mxu0 0
    %1608 = vmatpush1.bf16.msra.mxu0 0
    %1609 = vmatprep.subr.bf16.mxu0 %v1107
    %1610 = vmatpush1.bf16.msra.mxu0 %v1106
    %1611 = vmatprep.subr.bf16.mxu0 0
    %1612 = vmatpush2.bf16.msra.mxu0 0
    %1613 = vmatprep.subr.bf16.mxu0 0
    %1614 = vmatpush2.bf16.msra.mxu0 0
    %1615 = vmatprep.subr.bf16.mxu0 0
    %1616 = vmatpush2.bf16.msra.mxu0 0
    %1617 = vmatprep.subr.bf16.mxu0 0
    %1618 = vmatpush2.bf16.msra.mxu0 0
    %1619 = vmatprep.subr.bf16.mxu0 0
    %1620 = vmatpush2.bf16.msra.mxu0 0
    %1621 = vmatprep.subr.bf16.mxu0 0
    %1622 = vmatpush2.bf16.msra.mxu0 0
    %1623 = vmatprep.subr.bf16.mxu0 0
    %1624 = vmatpush2.bf16.msra.mxu0 0
    %1625 = vmatprep.subr.bf16.mxu0 0
    %1626 = vmatpush2.bf16.msra.mxu0 0
    %1627 = vmatprep.mubr.bf16.mxu0 0
    %1628 = vmatmul.mubr.bf16.gmra.mxu0 %v1306
    %v1629 = vpop.f32.mrf.mxu0
    %v1630 = vadd.f32 %v1589, %v1629
    %v1631 = vpop.f32.mrf.mxu0
    %v1632 = vadd.f32 %v1591, %v1631
    %v1633 = vpop.f32.mrf.mxu0
    %v1634 = vpop.f32.mrf.mxu0
    %1635 = vdwg.mxu0
    %v1636 = vmax.f32 %v1466, 0.0
    %v1637 = vmax.f32 %v1468, 0.0
    %v1638 = vmax.f32 %v1630, 0.0
    %v1639 = vmax.f32 %v1632, 0.0
    %v1640 = vpack.c.bf16 %v1636, %v1636
    %v1641 = vpack.c.bf16 %v1637, %v1637
    %v1642 = vpack.c.bf16 %v1638, %v1638
    %v1643 = vpack.c.bf16 %v1639, %v1639
    %v1644 = vld [vmem:[#allocation8] sm:$0xff]
    %v1645 = vld [vmem:[#allocation8 + $0x8] sm:$0xff]
    %v1646 = vld [vmem:[#allocation8 + $0x10] sm:$0xff]
    %v1647 = vld [vmem:[#allocation8 + $0x18] sm:$0xff]
    %v1648 = vld [vmem:[#allocation8 + $0x20] sm:$0xff]
    %v1649 = vld [vmem:[#allocation8 + $0x28] sm:$0xff]
    %v1650 = vld [vmem:[#allocation8 + $0x30] sm:$0xff]
    %v1651 = vld [vmem:[#allocation8 + $0x38] sm:$0xff]
    %v1652 = vld [vmem:[#allocation8 + $0x40] sm:$0xff]
    %v1653 = vld [vmem:[#allocation8 + $0x48] sm:$0xff]
    %v1654 = vld [vmem:[#allocation8 + $0x50] sm:$0xff]
    %v1655 = vld [vmem:[#allocation8 + $0x58] sm:$0xff]
    %v1656 = vld [vmem:[#allocation8 + $0x60] sm:$0xff]
    %v1657 = vld [vmem:[#allocation8 + $0x68] sm:$0xff]
    %v1658 = vld [vmem:[#allocation8 + $0x70] sm:$0xff]
    %v1659 = vld [vmem:[#allocation8 + $0x78] sm:$0xff]
    %v1660 = vld [vmem:[#allocation8 + $0x80] sm:$0xff]
    %v1661 = vld [vmem:[#allocation8 + $0x88] sm:$0xff]
    %v1662 = vld [vmem:[#allocation8 + $0x90] sm:$0xff]
    %v1663 = vld [vmem:[#allocation8 + $0x98] sm:$0xff]
    %v1664 = vld [vmem:[#allocation8 + $0xa0] sm:$0xff]
    %v1665 = vld [vmem:[#allocation8 + $0xa8] sm:$0xff]
    %v1666 = vld [vmem:[#allocation8 + $0xb0] sm:$0xff]
    %v1667 = vld [vmem:[#allocation8 + $0xb8] sm:$0xff]
    %v1668 = vld [vmem:[#allocation8 + $0xc0] sm:$0xff]
    %v1669 = vld [vmem:[#allocation8 + $0xc8] sm:$0xff]
    %v1670 = vld [vmem:[#allocation8 + $0xd0] sm:$0xff]
    %v1671 = vld [vmem:[#allocation8 + $0xd8] sm:$0xff]
    %v1672 = vld [vmem:[#allocation8 + $0xe0] sm:$0xff]
    %v1673 = vld [vmem:[#allocation8 + $0xe8] sm:$0xff]
    %v1674 = vld [vmem:[#allocation8 + $0xf0] sm:$0xff]
    %v1675 = vld [vmem:[#allocation8 + $0xf8] sm:$0xff]
    %v1676 = vld [vmem:[#allocation8 + $0x100] sm:$0xff]
    %v1677 = vld [vmem:[#allocation8 + $0x108] sm:$0xff]
    %v1678 = vld [vmem:[#allocation8 + $0x110] sm:$0xff]
    %v1679 = vld [vmem:[#allocation8 + $0x118] sm:$0xff]
    %v1680 = vld [vmem:[#allocation8 + $0x120] sm:$0xff]
    %v1681 = vld [vmem:[#allocation8 + $0x128] sm:$0xff]
    %v1682 = vld [vmem:[#allocation8 + $0x130] sm:$0xff]
    %v1683 = vld [vmem:[#allocation8 + $0x138] sm:$0xff]
    %v1684 = vld [vmem:[#allocation8 + $0x140] sm:$0xff]
    %v1685 = vld [vmem:[#allocation8 + $0x148] sm:$0xff]
    %v1686 = vld [vmem:[#allocation8 + $0x150] sm:$0xff]
    %v1687 = vld [vmem:[#allocation8 + $0x158] sm:$0xff]
    %v1688 = vld [vmem:[#allocation8 + $0x160] sm:$0xff]
    %v1689 = vld [vmem:[#allocation8 + $0x168] sm:$0xff]
    %v1690 = vld [vmem:[#allocation8 + $0x170] sm:$0xff]
    %v1691 = vld [vmem:[#allocation8 + $0x178] sm:$0xff]
    %v1692 = vld [vmem:[#allocation8 + $0x180] sm:$0xff]
    %v1693 = vld [vmem:[#allocation8 + $0x188] sm:$0xff]
    %v1694 = vld [vmem:[#allocation8 + $0x190] sm:$0xff]
    %v1695 = vld [vmem:[#allocation8 + $0x198] sm:$0xff]
    %v1696 = vld [vmem:[#allocation8 + $0x1a0] sm:$0xff]
    %v1697 = vld [vmem:[#allocation8 + $0x1a8] sm:$0xff]
    %v1698 = vld [vmem:[#allocation8 + $0x1b0] sm:$0xff]
    %v1699 = vld [vmem:[#allocation8 + $0x1b8] sm:$0xff]
    %v1700 = vld [vmem:[#allocation8 + $0x1c0] sm:$0xff]
    %v1701 = vld [vmem:[#allocation8 + $0x1c8] sm:$0xff]
    %v1702 = vld [vmem:[#allocation8 + $0x1d0] sm:$0xff]
    %v1703 = vld [vmem:[#allocation8 + $0x1d8] sm:$0xff]
    %v1704 = vld [vmem:[#allocation8 + $0x1e0] sm:$0xff]
    %v1705 = vld [vmem:[#allocation8 + $0x1e8] sm:$0xff]
    %v1706 = vld [vmem:[#allocation8 + $0x1f0] sm:$0xff]
    %v1707 = vld [vmem:[#allocation8 + $0x1f8] sm:$0xff]
    %v1708 = vld [vmem:[#allocation8 + $0x200] sm:$0xff]
    %v1709 = vld [vmem:[#allocation8 + $0x208] sm:$0xff]
    %v1710 = vld [vmem:[#allocation8 + $0x210] sm:$0xff]
    %v1711 = vld [vmem:[#allocation8 + $0x218] sm:$0xff]
    %v1712 = vld [vmem:[#allocation8 + $0x220] sm:$0xff]
    %v1713 = vld [vmem:[#allocation8 + $0x228] sm:$0xff]
    %v1714 = vld [vmem:[#allocation8 + $0x230] sm:$0xff]
    %v1715 = vld [vmem:[#allocation8 + $0x238] sm:$0xff]
    %v1716 = vld [vmem:[#allocation8 + $0x240] sm:$0xff]
    %v1717 = vld [vmem:[#allocation8 + $0x248] sm:$0xff]
    %v1718 = vld [vmem:[#allocation8 + $0x250] sm:$0xff]
    %v1719 = vld [vmem:[#allocation8 + $0x258] sm:$0xff]
    %v1720 = vld [vmem:[#allocation8 + $0x260] sm:$0xff]
    %v1721 = vld [vmem:[#allocation8 + $0x268] sm:$0xff]
    %v1722 = vld [vmem:[#allocation8 + $0x270] sm:$0xff]
    %v1723 = vld [vmem:[#allocation8 + $0x278] sm:$0xff]
    %v1724 = vld [vmem:[#allocation8 + $0x280] sm:$0xff]
    %v1725 = vld [vmem:[#allocation8 + $0x288] sm:$0xff]
    %v1726 = vld [vmem:[#allocation8 + $0x290] sm:$0xff]
    %v1727 = vld [vmem:[#allocation8 + $0x298] sm:$0xff]
    %v1728 = vld [vmem:[#allocation8 + $0x2a0] sm:$0xff]
    %v1729 = vld [vmem:[#allocation8 + $0x2a8] sm:$0xff]
    %v1730 = vld [vmem:[#allocation8 + $0x2b0] sm:$0xff]
    %v1731 = vld [vmem:[#allocation8 + $0x2b8] sm:$0xff]
    %v1732 = vld [vmem:[#allocation8 + $0x2c0] sm:$0xff]
    %v1733 = vld [vmem:[#allocation8 + $0x2c8] sm:$0xff]
    %v1734 = vld [vmem:[#allocation8 + $0x2d0] sm:$0xff]
    %v1735 = vld [vmem:[#allocation8 + $0x2d8] sm:$0xff]
    %v1736 = vld [vmem:[#allocation8 + $0x2e0] sm:$0xff]
    %v1737 = vld [vmem:[#allocation8 + $0x2e8] sm:$0xff]
    %v1738 = vld [vmem:[#allocation8 + $0x2f0] sm:$0xff]
    %v1739 = vld [vmem:[#allocation8 + $0x2f8] sm:$0xff]
    %v1740 = vld [vmem:[#allocation8 + $0x300] sm:$0xff]
    %v1741 = vld [vmem:[#allocation8 + $0x308] sm:$0xff]
    %v1742 = vld [vmem:[#allocation8 + $0x310] sm:$0xff]
    %v1743 = vld [vmem:[#allocation8 + $0x318] sm:$0xff]
    %v1744 = vld [vmem:[#allocation8 + $0x320] sm:$0xff]
    %v1745 = vld [vmem:[#allocation8 + $0x328] sm:$0xff]
    %v1746 = vld [vmem:[#allocation8 + $0x330] sm:$0xff]
    %v1747 = vld [vmem:[#allocation8 + $0x338] sm:$0xff]
    %v1748 = vld [vmem:[#allocation8 + $0x340] sm:$0xff]
    %v1749 = vld [vmem:[#allocation8 + $0x348] sm:$0xff]
    %v1750 = vld [vmem:[#allocation8 + $0x350] sm:$0xff]
    %v1751 = vld [vmem:[#allocation8 + $0x358] sm:$0xff]
    %v1752 = vld [vmem:[#allocation8 + $0x360] sm:$0xff]
    %v1753 = vld [vmem:[#allocation8 + $0x368] sm:$0xff]
    %v1754 = vld [vmem:[#allocation8 + $0x370] sm:$0xff]
    %v1755 = vld [vmem:[#allocation8 + $0x378] sm:$0xff]
    %v1756 = vld [vmem:[#allocation8 + $0x380] sm:$0xff]
    %v1757 = vld [vmem:[#allocation8 + $0x388] sm:$0xff]
    %v1758 = vld [vmem:[#allocation8 + $0x390] sm:$0xff]
    %v1759 = vld [vmem:[#allocation8 + $0x398] sm:$0xff]
    %v1760 = vld [vmem:[#allocation8 + $0x3a0] sm:$0xff]
    %v1761 = vld [vmem:[#allocation8 + $0x3a8] sm:$0xff]
    %v1762 = vld [vmem:[#allocation8 + $0x3b0] sm:$0xff]
    %v1763 = vld [vmem:[#allocation8 + $0x3b8] sm:$0xff]
    %v1764 = vld [vmem:[#allocation8 + $0x3c0] sm:$0xff]
    %v1765 = vld [vmem:[#allocation8 + $0x3c8] sm:$0xff]
    %v1766 = vld [vmem:[#allocation8 + $0x3d0] sm:$0xff]
    %v1767 = vld [vmem:[#allocation8 + $0x3d8] sm:$0xff]
    %v1768 = vld [vmem:[#allocation8 + $0x3e0] sm:$0xff]
    %v1769 = vld [vmem:[#allocation8 + $0x3e8] sm:$0xff]
    %v1770 = vld [vmem:[#allocation8 + $0x3f0] sm:$0xff]
    %v1771 = vld [vmem:[#allocation8 + $0x3f8] sm:$0xff]
    %v1772 = vld [vmem:[%s4] sm:$0xf]
    %v1774 = vlaneseq
    %v1775 = vshrl.u32 %v1774, 7
    %v1776 = vsub.s32 0, %v1775
    %v1777 = vrot.slane %v1772, %v1776
    %v1778 = vlaneseq
    %v1779 = vshrl.u32 %v1778, 7
    %v1780 = vsub.s32 1, %v1779
    %v1781 = vrot.slane %v1772, %v1780
    %v1782 = vlaneseq
    %v1783 = vshrl.u32 %v1782, 7
    %v1784 = vsub.s32 2, %v1783
    %v1785 = vrot.slane %v1772, %v1784
    %v1786 = vlaneseq
    %v1787 = vshrl.u32 %v1786, 7
    %v1788 = vsub.s32 3, %v1787
    %v1789 = vrot.slane %v1772, %v1788
    %v1922 = vunpack.c.l.b16 %v1644
    %v1923 = vunpack.c.h.b16 %v1644
    %v1924 = vunpack.c.l.b16 %v1645
    %v1925 = vunpack.c.h.b16 %v1645
    %v1926 = vunpack.c.l.b16 %v1646
    %v1927 = vunpack.c.h.b16 %v1646
    %v1928 = vunpack.c.l.b16 %v1647
    %v1929 = vunpack.c.h.b16 %v1647
    %v1930 = vunpack.c.l.b16 %v1648
    %v1931 = vunpack.c.h.b16 %v1648
    %v1932 = vunpack.c.l.b16 %v1649
    %v1933 = vunpack.c.h.b16 %v1649
    %v1934 = vunpack.c.l.b16 %v1650
    %v1935 = vunpack.c.h.b16 %v1650
    %v1936 = vunpack.c.l.b16 %v1651
    %v1937 = vunpack.c.h.b16 %v1651
    %v1938 = vunpack.c.l.b16 %v1652
    %v1939 = vunpack.c.h.b16 %v1652
    %v1940 = vunpack.c.l.b16 %v1653
    %v1941 = vunpack.c.h.b16 %v1653
    %v1942 = vunpack.c.l.b16 %v1654
    %v1943 = vunpack.c.h.b16 %v1654
    %v1944 = vunpack.c.l.b16 %v1655
    %v1945 = vunpack.c.h.b16 %v1655
    %v1946 = vunpack.c.l.b16 %v1656
    %v1947 = vunpack.c.h.b16 %v1656
    %v1948 = vunpack.c.l.b16 %v1657
    %v1949 = vunpack.c.h.b16 %v1657
    %v1950 = vunpack.c.l.b16 %v1658
    %v1951 = vunpack.c.h.b16 %v1658
    %v1952 = vunpack.c.l.b16 %v1659
    %v1953 = vunpack.c.h.b16 %v1659
    %v1954 = vunpack.c.l.b16 %v1660
    %v1955 = vunpack.c.h.b16 %v1660
    %v1956 = vunpack.c.l.b16 %v1661
    %v1957 = vunpack.c.h.b16 %v1661
    %v1958 = vunpack.c.l.b16 %v1662
    %v1959 = vunpack.c.h.b16 %v1662
    %v1960 = vunpack.c.l.b16 %v1663
    %v1961 = vunpack.c.h.b16 %v1663
    %v1962 = vunpack.c.l.b16 %v1664
    %v1963 = vunpack.c.h.b16 %v1664
    %v1964 = vunpack.c.l.b16 %v1665
    %v1965 = vunpack.c.h.b16 %v1665
    %v1966 = vunpack.c.l.b16 %v1666
    %v1967 = vunpack.c.h.b16 %v1666
    %v1968 = vunpack.c.l.b16 %v1667
    %v1969 = vunpack.c.h.b16 %v1667
    %v1970 = vunpack.c.l.b16 %v1668
    %v1971 = vunpack.c.h.b16 %v1668
    %v1972 = vunpack.c.l.b16 %v1669
    %v1973 = vunpack.c.h.b16 %v1669
    %v1974 = vunpack.c.l.b16 %v1670
    %v1975 = vunpack.c.h.b16 %v1670
    %v1976 = vunpack.c.l.b16 %v1671
    %v1977 = vunpack.c.h.b16 %v1671
    %v1978 = vunpack.c.l.b16 %v1672
    %v1979 = vunpack.c.h.b16 %v1672
    %v1980 = vunpack.c.l.b16 %v1673
    %v1981 = vunpack.c.h.b16 %v1673
    %v1982 = vunpack.c.l.b16 %v1674
    %v1983 = vunpack.c.h.b16 %v1674
    %v1984 = vunpack.c.l.b16 %v1675
    %v1985 = vunpack.c.h.b16 %v1675
    %v1986 = vunpack.c.l.b16 %v1676
    %v1987 = vunpack.c.h.b16 %v1676
    %v1988 = vunpack.c.l.b16 %v1677
    %v1989 = vunpack.c.h.b16 %v1677
    %v1990 = vunpack.c.l.b16 %v1678
    %v1991 = vunpack.c.h.b16 %v1678
    %v1992 = vunpack.c.l.b16 %v1679
    %v1993 = vunpack.c.h.b16 %v1679
    %v1994 = vunpack.c.l.b16 %v1680
    %v1995 = vunpack.c.h.b16 %v1680
    %v1996 = vunpack.c.l.b16 %v1681
    %v1997 = vunpack.c.h.b16 %v1681
    %v1998 = vunpack.c.l.b16 %v1682
    %v1999 = vunpack.c.h.b16 %v1682
    %v2000 = vunpack.c.l.b16 %v1683
    %v2001 = vunpack.c.h.b16 %v1683
    %v2002 = vunpack.c.l.b16 %v1684
    %v2003 = vunpack.c.h.b16 %v1684
    %v2004 = vunpack.c.l.b16 %v1685
    %v2005 = vunpack.c.h.b16 %v1685
    %v2006 = vunpack.c.l.b16 %v1686
    %v2007 = vunpack.c.h.b16 %v1686
    %v2008 = vunpack.c.l.b16 %v1687
    %v2009 = vunpack.c.h.b16 %v1687
    %v2010 = vunpack.c.l.b16 %v1688
    %v2011 = vunpack.c.h.b16 %v1688
    %v2012 = vunpack.c.l.b16 %v1689
    %v2013 = vunpack.c.h.b16 %v1689
    %v2014 = vunpack.c.l.b16 %v1690
    %v2015 = vunpack.c.h.b16 %v1690
    %v2016 = vunpack.c.l.b16 %v1691
    %v2017 = vunpack.c.h.b16 %v1691
    %v2018 = vunpack.c.l.b16 %v1692
    %v2019 = vunpack.c.h.b16 %v1692
    %v2020 = vunpack.c.l.b16 %v1693
    %v2021 = vunpack.c.h.b16 %v1693
    %v2022 = vunpack.c.l.b16 %v1694
    %v2023 = vunpack.c.h.b16 %v1694
    %v2024 = vunpack.c.l.b16 %v1695
    %v2025 = vunpack.c.h.b16 %v1695
    %v2026 = vunpack.c.l.b16 %v1696
    %v2027 = vunpack.c.h.b16 %v1696
    %v2028 = vunpack.c.l.b16 %v1697
    %v2029 = vunpack.c.h.b16 %v1697
    %v2030 = vunpack.c.l.b16 %v1698
    %v2031 = vunpack.c.h.b16 %v1698
    %v2032 = vunpack.c.l.b16 %v1699
    %v2033 = vunpack.c.h.b16 %v1699
    %v2034 = vunpack.c.l.b16 %v1700
    %v2035 = vunpack.c.h.b16 %v1700
    %v2036 = vunpack.c.l.b16 %v1701
    %v2037 = vunpack.c.h.b16 %v1701
    %v2038 = vunpack.c.l.b16 %v1702
    %v2039 = vunpack.c.h.b16 %v1702
    %v2040 = vunpack.c.l.b16 %v1703
    %v2041 = vunpack.c.h.b16 %v1703
    %v2042 = vunpack.c.l.b16 %v1704
    %v2043 = vunpack.c.h.b16 %v1704
    %v2044 = vunpack.c.l.b16 %v1705
    %v2045 = vunpack.c.h.b16 %v1705
    %v2046 = vunpack.c.l.b16 %v1706
    %v2047 = vunpack.c.h.b16 %v1706
    %v2048 = vunpack.c.l.b16 %v1707
    %v2049 = vunpack.c.h.b16 %v1707
    %v2050 = vunpack.c.l.b16 %v1708
    %v2051 = vunpack.c.h.b16 %v1708
    %v2052 = vunpack.c.l.b16 %v1709
    %v2053 = vunpack.c.h.b16 %v1709
    %v2054 = vunpack.c.l.b16 %v1710
    %v2055 = vunpack.c.h.b16 %v1710
    %v2056 = vunpack.c.l.b16 %v1711
    %v2057 = vunpack.c.h.b16 %v1711
    %v2058 = vunpack.c.l.b16 %v1712
    %v2059 = vunpack.c.h.b16 %v1712
    %v2060 = vunpack.c.l.b16 %v1713
    %v2061 = vunpack.c.h.b16 %v1713
    %v2062 = vunpack.c.l.b16 %v1714
    %v2063 = vunpack.c.h.b16 %v1714
    %v2064 = vunpack.c.l.b16 %v1715
    %v2065 = vunpack.c.h.b16 %v1715
    %v2066 = vunpack.c.l.b16 %v1716
    %v2067 = vunpack.c.h.b16 %v1716
    %v2068 = vunpack.c.l.b16 %v1717
    %v2069 = vunpack.c.h.b16 %v1717
    %v2070 = vunpack.c.l.b16 %v1718
    %v2071 = vunpack.c.h.b16 %v1718
    %v2072 = vunpack.c.l.b16 %v1719
    %v2073 = vunpack.c.h.b16 %v1719
    %v2074 = vunpack.c.l.b16 %v1720
    %v2075 = vunpack.c.h.b16 %v1720
    %v2076 = vunpack.c.l.b16 %v1721
    %v2077 = vunpack.c.h.b16 %v1721
    %v2078 = vunpack.c.l.b16 %v1722
    %v2079 = vunpack.c.h.b16 %v1722
    %v2080 = vunpack.c.l.b16 %v1723
    %v2081 = vunpack.c.h.b16 %v1723
    %v2082 = vunpack.c.l.b16 %v1724
    %v2083 = vunpack.c.h.b16 %v1724
    %v2084 = vunpack.c.l.b16 %v1725
    %v2085 = vunpack.c.h.b16 %v1725
    %v2086 = vunpack.c.l.b16 %v1726
    %v2087 = vunpack.c.h.b16 %v1726
    %v2088 = vunpack.c.l.b16 %v1727
    %v2089 = vunpack.c.h.b16 %v1727
    %v2090 = vunpack.c.l.b16 %v1728
    %v2091 = vunpack.c.h.b16 %v1728
    %v2092 = vunpack.c.l.b16 %v1729
    %v2093 = vunpack.c.h.b16 %v1729
    %v2094 = vunpack.c.l.b16 %v1730
    %v2095 = vunpack.c.h.b16 %v1730
    %v2096 = vunpack.c.l.b16 %v1731
    %v2097 = vunpack.c.h.b16 %v1731
    %v2098 = vunpack.c.l.b16 %v1732
    %v2099 = vunpack.c.h.b16 %v1732
    %v2100 = vunpack.c.l.b16 %v1733
    %v2101 = vunpack.c.h.b16 %v1733
    %v2102 = vunpack.c.l.b16 %v1734
    %v2103 = vunpack.c.h.b16 %v1734
    %v2104 = vunpack.c.l.b16 %v1735
    %v2105 = vunpack.c.h.b16 %v1735
    %v2106 = vunpack.c.l.b16 %v1736
    %v2107 = vunpack.c.h.b16 %v1736
    %v2108 = vunpack.c.l.b16 %v1737
    %v2109 = vunpack.c.h.b16 %v1737
    %v2110 = vunpack.c.l.b16 %v1738
    %v2111 = vunpack.c.h.b16 %v1738
    %v2112 = vunpack.c.l.b16 %v1739
    %v2113 = vunpack.c.h.b16 %v1739
    %v2114 = vunpack.c.l.b16 %v1740
    %v2115 = vunpack.c.h.b16 %v1740
    %v2116 = vunpack.c.l.b16 %v1741
    %v2117 = vunpack.c.h.b16 %v1741
    %v2118 = vunpack.c.l.b16 %v1742
    %v2119 = vunpack.c.h.b16 %v1742
    %v2120 = vunpack.c.l.b16 %v1743
    %v2121 = vunpack.c.h.b16 %v1743
    %v2122 = vunpack.c.l.b16 %v1744
    %v2123 = vunpack.c.h.b16 %v1744
    %v2124 = vunpack.c.l.b16 %v1745
    %v2125 = vunpack.c.h.b16 %v1745
    %v2126 = vunpack.c.l.b16 %v1746
    %v2127 = vunpack.c.h.b16 %v1746
    %v2128 = vunpack.c.l.b16 %v1747
    %v2129 = vunpack.c.h.b16 %v1747
    %v2130 = vunpack.c.l.b16 %v1748
    %v2131 = vunpack.c.h.b16 %v1748
    %v2132 = vunpack.c.l.b16 %v1749
    %v2133 = vunpack.c.h.b16 %v1749
    %v2134 = vunpack.c.l.b16 %v1750
    %v2135 = vunpack.c.h.b16 %v1750
    %v2136 = vunpack.c.l.b16 %v1751
    %v2137 = vunpack.c.h.b16 %v1751
    %v2138 = vunpack.c.l.b16 %v1752
    %v2139 = vunpack.c.h.b16 %v1752
    %v2140 = vunpack.c.l.b16 %v1753
    %v2141 = vunpack.c.h.b16 %v1753
    %v2142 = vunpack.c.l.b16 %v1754
    %v2143 = vunpack.c.h.b16 %v1754
    %v2144 = vunpack.c.l.b16 %v1755
    %v2145 = vunpack.c.h.b16 %v1755
    %v2146 = vunpack.c.l.b16 %v1756
    %v2147 = vunpack.c.h.b16 %v1756
    %v2148 = vunpack.c.l.b16 %v1757
    %v2149 = vunpack.c.h.b16 %v1757
    %v2150 = vunpack.c.l.b16 %v1758
    %v2151 = vunpack.c.h.b16 %v1758
    %v2152 = vunpack.c.l.b16 %v1759
    %v2153 = vunpack.c.h.b16 %v1759
    %v2154 = vunpack.c.l.b16 %v1760
    %v2155 = vunpack.c.h.b16 %v1760
    %v2156 = vunpack.c.l.b16 %v1761
    %v2157 = vunpack.c.h.b16 %v1761
    %v2158 = vunpack.c.l.b16 %v1762
    %v2159 = vunpack.c.h.b16 %v1762
    %v2160 = vunpack.c.l.b16 %v1763
    %v2161 = vunpack.c.h.b16 %v1763
    %v2162 = vunpack.c.l.b16 %v1764
    %v2163 = vunpack.c.h.b16 %v1764
    %v2164 = vunpack.c.l.b16 %v1765
    %v2165 = vunpack.c.h.b16 %v1765
    %v2166 = vunpack.c.l.b16 %v1766
    %v2167 = vunpack.c.h.b16 %v1766
    %v2168 = vunpack.c.l.b16 %v1767
    %v2169 = vunpack.c.h.b16 %v1767
    %v2170 = vunpack.c.l.b16 %v1768
    %v2171 = vunpack.c.h.b16 %v1768
    %v2172 = vunpack.c.l.b16 %v1769
    %v2173 = vunpack.c.h.b16 %v1769
    %v2174 = vunpack.c.l.b16 %v1770
    %v2175 = vunpack.c.h.b16 %v1770
    %v2176 = vunpack.c.l.b16 %v1771
    %v2177 = vunpack.c.h.b16 %v1771
    %v2178 = vpack.c.b16 %v1926, %v1922
    %v2179 = vpack.c.b16 %v1927, %v1923
    %v2180 = vpack.c.b16 %v1928, %v1924
    %v2181 = vpack.c.b16 %v1929, %v1925
    %v2182 = vpack.c.b16 %v1934, %v1930
    %v2183 = vpack.c.b16 %v1935, %v1931
    %v2184 = vpack.c.b16 %v1936, %v1932
    %v2185 = vpack.c.b16 %v1937, %v1933
    %v2186 = vpack.c.b16 %v1942, %v1938
    %v2187 = vpack.c.b16 %v1943, %v1939
    %v2188 = vpack.c.b16 %v1944, %v1940
    %v2189 = vpack.c.b16 %v1945, %v1941
    %v2190 = vpack.c.b16 %v1950, %v1946
    %v2191 = vpack.c.b16 %v1951, %v1947
    %v2192 = vpack.c.b16 %v1952, %v1948
    %v2193 = vpack.c.b16 %v1953, %v1949
    %v2194 = vpack.c.b16 %v1958, %v1954
    %v2195 = vpack.c.b16 %v1959, %v1955
    %v2196 = vpack.c.b16 %v1960, %v1956
    %v2197 = vpack.c.b16 %v1961, %v1957
    %v2198 = vpack.c.b16 %v1966, %v1962
    %v2199 = vpack.c.b16 %v1967, %v1963
    %v2200 = vpack.c.b16 %v1968, %v1964
    %v2201 = vpack.c.b16 %v1969, %v1965
    %v2202 = vpack.c.b16 %v1974, %v1970
    %v2203 = vpack.c.b16 %v1975, %v1971
    %v2204 = vpack.c.b16 %v1976, %v1972
    %v2205 = vpack.c.b16 %v1977, %v1973
    %v2206 = vpack.c.b16 %v1982, %v1978
    %v2207 = vpack.c.b16 %v1983, %v1979
    %v2208 = vpack.c.b16 %v1984, %v1980
    %v2209 = vpack.c.b16 %v1985, %v1981
    %v2210 = vpack.c.b16 %v1990, %v1986
    %v2211 = vpack.c.b16 %v1991, %v1987
    %v2212 = vpack.c.b16 %v1992, %v1988
    %v2213 = vpack.c.b16 %v1993, %v1989
    %v2214 = vpack.c.b16 %v1998, %v1994
    %v2215 = vpack.c.b16 %v1999, %v1995
    %v2216 = vpack.c.b16 %v2000, %v1996
    %v2217 = vpack.c.b16 %v2001, %v1997
    %v2218 = vpack.c.b16 %v2006, %v2002
    %v2219 = vpack.c.b16 %v2007, %v2003
    %v2220 = vpack.c.b16 %v2008, %v2004
    %v2221 = vpack.c.b16 %v2009, %v2005
    %v2222 = vpack.c.b16 %v2014, %v2010
    %v2223 = vpack.c.b16 %v2015, %v2011
    %v2224 = vpack.c.b16 %v2016, %v2012
    %v2225 = vpack.c.b16 %v2017, %v2013
    %v2226 = vpack.c.b16 %v2022, %v2018
    %v2227 = vpack.c.b16 %v2023, %v2019
    %v2228 = vpack.c.b16 %v2024, %v2020
    %v2229 = vpack.c.b16 %v2025, %v2021
    %v2230 = vpack.c.b16 %v2030, %v2026
    %v2231 = vpack.c.b16 %v2031, %v2027
    %v2232 = vpack.c.b16 %v2032, %v2028
    %v2233 = vpack.c.b16 %v2033, %v2029
    %v2234 = vpack.c.b16 %v2038, %v2034
    %v2235 = vpack.c.b16 %v2039, %v2035
    %v2236 = vpack.c.b16 %v2040, %v2036
    %v2237 = vpack.c.b16 %v2041, %v2037
    %v2238 = vpack.c.b16 %v2046, %v2042
    %v2239 = vpack.c.b16 %v2047, %v2043
    %v2240 = vpack.c.b16 %v2048, %v2044
    %v2241 = vpack.c.b16 %v2049, %v2045
    %v2242 = vpack.c.b16 %v2054, %v2050
    %v2243 = vpack.c.b16 %v2055, %v2051
    %v2244 = vpack.c.b16 %v2056, %v2052
    %v2245 = vpack.c.b16 %v2057, %v2053
    %v2246 = vpack.c.b16 %v2062, %v2058
    %v2247 = vpack.c.b16 %v2063, %v2059
    %v2248 = vpack.c.b16 %v2064, %v2060
    %v2249 = vpack.c.b16 %v2065, %v2061
    %v2250 = vpack.c.b16 %v2070, %v2066
    %v2251 = vpack.c.b16 %v2071, %v2067
    %v2252 = vpack.c.b16 %v2072, %v2068
    %v2253 = vpack.c.b16 %v2073, %v2069
    %v2254 = vpack.c.b16 %v2078, %v2074
    %v2255 = vpack.c.b16 %v2079, %v2075
    %v2256 = vpack.c.b16 %v2080, %v2076
    %v2257 = vpack.c.b16 %v2081, %v2077
    %v2258 = vpack.c.b16 %v2086, %v2082
    %v2259 = vpack.c.b16 %v2087, %v2083
    %v2260 = vpack.c.b16 %v2088, %v2084
    %v2261 = vpack.c.b16 %v2089, %v2085
    %v2262 = vpack.c.b16 %v2094, %v2090
    %v2263 = vpack.c.b16 %v2095, %v2091
    %v2264 = vpack.c.b16 %v2096, %v2092
    %v2265 = vpack.c.b16 %v2097, %v2093
    %v2266 = vpack.c.b16 %v2102, %v2098
    %v2267 = vpack.c.b16 %v2103, %v2099
    %v2268 = vpack.c.b16 %v2104, %v2100
    %v2269 = vpack.c.b16 %v2105, %v2101
    %v2270 = vpack.c.b16 %v2110, %v2106
    %v2271 = vpack.c.b16 %v2111, %v2107
    %v2272 = vpack.c.b16 %v2112, %v2108
    %v2273 = vpack.c.b16 %v2113, %v2109
    %v2274 = vpack.c.b16 %v2118, %v2114
    %v2275 = vpack.c.b16 %v2119, %v2115
    %v2276 = vpack.c.b16 %v2120, %v2116
    %v2277 = vpack.c.b16 %v2121, %v2117
    %v2278 = vpack.c.b16 %v2126, %v2122
    %v2279 = vpack.c.b16 %v2127, %v2123
    %v2280 = vpack.c.b16 %v2128, %v2124
    %v2281 = vpack.c.b16 %v2129, %v2125
    %v2282 = vpack.c.b16 %v2134, %v2130
    %v2283 = vpack.c.b16 %v2135, %v2131
    %v2284 = vpack.c.b16 %v2136, %v2132
    %v2285 = vpack.c.b16 %v2137, %v2133
    %v2286 = vpack.c.b16 %v2142, %v2138
    %v2287 = vpack.c.b16 %v2143, %v2139
    %v2288 = vpack.c.b16 %v2144, %v2140
    %v2289 = vpack.c.b16 %v2145, %v2141
    %v2290 = vpack.c.b16 %v2150, %v2146
    %v2291 = vpack.c.b16 %v2151, %v2147
    %v2292 = vpack.c.b16 %v2152, %v2148
    %v2293 = vpack.c.b16 %v2153, %v2149
    %v2294 = vpack.c.b16 %v2158, %v2154
    %v2295 = vpack.c.b16 %v2159, %v2155
    %v2296 = vpack.c.b16 %v2160, %v2156
    %v2297 = vpack.c.b16 %v2161, %v2157
    %v2298 = vpack.c.b16 %v2166, %v2162
    %v2299 = vpack.c.b16 %v2167, %v2163
    %v2300 = vpack.c.b16 %v2168, %v2164
    %v2301 = vpack.c.b16 %v2169, %v2165
    %v2302 = vpack.c.b16 %v2174, %v2170
    %v2303 = vpack.c.b16 %v2175, %v2171
    %v2304 = vpack.c.b16 %v2176, %v2172
    %v2305 = vpack.c.b16 %v2177, %v2173
    %2434 = vmatprep.subr.bf16.mxu0 %v2207
    %2435 = vmatpush1.bf16.msra.mxu0 %v2206
    %2436 = vmatprep.subr.bf16.mxu0 %v2203
    %2437 = vmatpush1.bf16.msra.mxu0 %v2202
    %2438 = vmatprep.subr.bf16.mxu0 %v2199
    %2439 = vmatpush1.bf16.msra.mxu0 %v2198
    %2440 = vmatprep.subr.bf16.mxu0 %v2195
    %2441 = vmatpush1.bf16.msra.mxu0 %v2194
    %2442 = vmatprep.subr.bf16.mxu0 %v2191
    %2443 = vmatpush1.bf16.msra.mxu0 %v2190
    %2444 = vmatprep.subr.bf16.mxu0 %v2187
    %2445 = vmatpush1.bf16.msra.mxu0 %v2186
    %2446 = vmatprep.subr.bf16.mxu0 %v2183
    %2447 = vmatpush1.bf16.msra.mxu0 %v2182
    %2448 = vmatprep.subr.bf16.mxu0 %v2179
    %2449 = vmatpush1.bf16.msra.mxu0 %v2178
    %2450 = vmatprep.subr.bf16.mxu0 %v2239
    %2451 = vmatpush2.bf16.msra.mxu0 %v2238
    %2452 = vmatprep.subr.bf16.mxu0 %v2235
    %2453 = vmatpush2.bf16.msra.mxu0 %v2234
    %2454 = vmatprep.subr.bf16.mxu0 %v2231
    %2455 = vmatpush2.bf16.msra.mxu0 %v2230
    %2456 = vmatprep.subr.bf16.mxu0 %v2227
    %2457 = vmatpush2.bf16.msra.mxu0 %v2226
    %2458 = vmatprep.subr.bf16.mxu0 %v2223
    %2459 = vmatpush2.bf16.msra.mxu0 %v2222
    %2460 = vmatprep.subr.bf16.mxu0 %v2219
    %2461 = vmatpush2.bf16.msra.mxu0 %v2218
    %2462 = vmatprep.subr.bf16.mxu0 %v2215
    %2463 = vmatpush2.bf16.msra.mxu0 %v2214
    %2464 = vmatprep.subr.bf16.mxu0 %v2211
    %2465 = vmatpush2.bf16.msra.mxu0 %v2210
    %2466 = vmatprep.mubr.bf16.mxu0 %v1641
    %2467 = vmatmul.mubr.bf16.gmra.mxu0 %v1640
    %v2468 = vpop.f32.mrf.mxu0
    %v2469 = vadd.f32 %v1777, %v2468
    %v2470 = vpop.f32.mrf.mxu0
    %v2471 = vadd.f32 %v1781, %v2470
    %v2472 = vpop.f32.mrf.mxu0
    %v2473 = vpop.f32.mrf.mxu0
    %2474 = vdwg.mxu0
    %2475 = vmatprep.subr.bf16.mxu0 %v2271
    %2476 = vmatpush1.bf16.msra.mxu0 %v2270
    %2477 = vmatprep.subr.bf16.mxu0 %v2267
    %2478 = vmatpush1.bf16.msra.mxu0 %v2266
    %2479 = vmatprep.subr.bf16.mxu0 %v2263
    %2480 = vmatpush1.bf16.msra.mxu0 %v2262
    %2481 = vmatprep.subr.bf16.mxu0 %v2259
    %2482 = vmatpush1.bf16.msra.mxu0 %v2258
    %2483 = vmatprep.subr.bf16.mxu0 %v2255
    %2484 = vmatpush1.bf16.msra.mxu0 %v2254
    %2485 = vmatprep.subr.bf16.mxu0 %v2251
    %2486 = vmatpush1.bf16.msra.mxu0 %v2250
    %2487 = vmatprep.subr.bf16.mxu0 %v2247
    %2488 = vmatpush1.bf16.msra.mxu0 %v2246
    %2489 = vmatprep.subr.bf16.mxu0 %v2243
    %2490 = vmatpush1.bf16.msra.mxu0 %v2242
    %2491 = vmatprep.subr.bf16.mxu0 %v2303
    %2492 = vmatpush2.bf16.msra.mxu0 %v2302
    %2493 = vmatprep.subr.bf16.mxu0 %v2299
    %2494 = vmatpush2.bf16.msra.mxu0 %v2298
    %2495 = vmatprep.subr.bf16.mxu0 %v2295
    %2496 = vmatpush2.bf16.msra.mxu0 %v2294
    %2497 = vmatprep.subr.bf16.mxu0 %v2291
    %2498 = vmatpush2.bf16.msra.mxu0 %v2290
    %2499 = vmatprep.subr.bf16.mxu0 %v2287
    %2500 = vmatpush2.bf16.msra.mxu0 %v2286
    %2501 = vmatprep.subr.bf16.mxu0 %v2283
    %2502 = vmatpush2.bf16.msra.mxu0 %v2282
    %2503 = vmatprep.subr.bf16.mxu0 %v2279
    %2504 = vmatpush2.bf16.msra.mxu0 %v2278
    %2505 = vmatprep.subr.bf16.mxu0 %v2275
    %2506 = vmatpush2.bf16.msra.mxu0 %v2274
    %2507 = vmatprep.mubr.bf16.mxu0 %v1643
    %2508 = vmatmul.mubr.bf16.gmra.mxu0 %v1642
    %v2509 = vpop.f32.mrf.mxu0
    %v2510 = vadd.f32 %v2469, %v2509
    %v2511 = vpop.f32.mrf.mxu0
    %v2512 = vadd.f32 %v2471, %v2511
    %v2513 = vpop.f32.mrf.mxu0
    %v2514 = vpop.f32.mrf.mxu0
    %2515 = vdwg.mxu0
    %2516 = vmatprep.subr.bf16.mxu0 %v2209
    %2517 = vmatpush1.bf16.msra.mxu0 %v2208
    %2518 = vmatprep.subr.bf16.mxu0 %v2205
    %2519 = vmatpush1.bf16.msra.mxu0 %v2204
    %2520 = vmatprep.subr.bf16.mxu0 %v2201
    %2521 = vmatpush1.bf16.msra.mxu0 %v2200
    %2522 = vmatprep.subr.bf16.mxu0 %v2197
    %2523 = vmatpush1.bf16.msra.mxu0 %v2196
    %2524 = vmatprep.subr.bf16.mxu0 %v2193
    %2525 = vmatpush1.bf16.msra.mxu0 %v2192
    %2526 = vmatprep.subr.bf16.mxu0 %v2189
    %2527 = vmatpush1.bf16.msra.mxu0 %v2188
    %2528 = vmatprep.subr.bf16.mxu0 %v2185
    %2529 = vmatpush1.bf16.msra.mxu0 %v2184
    %2530 = vmatprep.subr.bf16.mxu0 %v2181
    %2531 = vmatpush1.bf16.msra.mxu0 %v2180
    %2532 = vmatprep.subr.bf16.mxu0 %v2241
    %2533 = vmatpush2.bf16.msra.mxu0 %v2240
    %2534 = vmatprep.subr.bf16.mxu0 %v2237
    %2535 = vmatpush2.bf16.msra.mxu0 %v2236
    %2536 = vmatprep.subr.bf16.mxu0 %v2233
    %2537 = vmatpush2.bf16.msra.mxu0 %v2232
    %2538 = vmatprep.subr.bf16.mxu0 %v2229
    %2539 = vmatpush2.bf16.msra.mxu0 %v2228
    %2540 = vmatprep.subr.bf16.mxu0 %v2225
    %2541 = vmatpush2.bf16.msra.mxu0 %v2224
    %2542 = vmatprep.subr.bf16.mxu0 %v2221
    %2543 = vmatpush2.bf16.msra.mxu0 %v2220
    %2544 = vmatprep.subr.bf16.mxu0 %v2217
    %2545 = vmatpush2.bf16.msra.mxu0 %v2216
    %2546 = vmatprep.subr.bf16.mxu0 %v2213
    %2547 = vmatpush2.bf16.msra.mxu0 %v2212
    %2548 = vmatprep.mubr.bf16.mxu0 %v1641
    %2549 = vmatmul.mubr.bf16.gmra.mxu0 %v1640
    %v2550 = vpop.f32.mrf.mxu0
    %v2551 = vadd.f32 %v1785, %v2550
    %v2552 = vpop.f32.mrf.mxu0
    %v2553 = vadd.f32 %v1789, %v2552
    %v2554 = vpop.f32.mrf.mxu0
    %v2555 = vpop.f32.mrf.mxu0
    %2556 = vdwg.mxu0
    %2557 = vmatprep.subr.bf16.mxu0 %v2273
    %2558 = vmatpush1.bf16.msra.mxu0 %v2272
    %2559 = vmatprep.subr.bf16.mxu0 %v2269
    %2560 = vmatpush1.bf16.msra.mxu0 %v2268
    %2561 = vmatprep.subr.bf16.mxu0 %v2265
    %2562 = vmatpush1.bf16.msra.mxu0 %v2264
    %2563 = vmatprep.subr.bf16.mxu0 %v2261
    %2564 = vmatpush1.bf16.msra.mxu0 %v2260
    %2565 = vmatprep.subr.bf16.mxu0 %v2257
    %2566 = vmatpush1.bf16.msra.mxu0 %v2256
    %2567 = vmatprep.subr.bf16.mxu0 %v2253
    %2568 = vmatpush1.bf16.msra.mxu0 %v2252
    %2569 = vmatprep.subr.bf16.mxu0 %v2249
    %2570 = vmatpush1.bf16.msra.mxu0 %v2248
    %2571 = vmatprep.subr.bf16.mxu0 %v2245
    %2572 = vmatpush1.bf16.msra.mxu0 %v2244
    %2573 = vmatprep.subr.bf16.mxu0 %v2305
    %2574 = vmatpush2.bf16.msra.mxu0 %v2304
    %2575 = vmatprep.subr.bf16.mxu0 %v2301
    %2576 = vmatpush2.bf16.msra.mxu0 %v2300
    %2577 = vmatprep.subr.bf16.mxu0 %v2297
    %2578 = vmatpush2.bf16.msra.mxu0 %v2296
    %2579 = vmatprep.subr.bf16.mxu0 %v2293
    %2580 = vmatpush2.bf16.msra.mxu0 %v2292
    %2581 = vmatprep.subr.bf16.mxu0 %v2289
    %2582 = vmatpush2.bf16.msra.mxu0 %v2288
    %2583 = vmatprep.subr.bf16.mxu0 %v2285
    %2584 = vmatpush2.bf16.msra.mxu0 %v2284
    %2585 = vmatprep.subr.bf16.mxu0 %v2281
    %2586 = vmatpush2.bf16.msra.mxu0 %v2280
    %2587 = vmatprep.subr.bf16.mxu0 %v2277
    %2588 = vmatpush2.bf16.msra.mxu0 %v2276
    %2589 = vmatprep.mubr.bf16.mxu0 %v1643
    %2590 = vmatmul.mubr.bf16.gmra.mxu0 %v1642
    %v2591 = vpop.f32.mrf.mxu0
    %v2592 = vadd.f32 %v2551, %v2591
    %v2593 = vpop.f32.mrf.mxu0
    %v2594 = vadd.f32 %v2553, %v2593
    %v2595 = vpop.f32.mrf.mxu0
    %v2596 = vpop.f32.mrf.mxu0
    %2597 = vdwg.mxu0
    %v2598 = vmax.f32 %v2510, 0.0
    %v2599 = vmax.f32 %v2512, 0.0
    %v2600 = vmax.f32 %v2592, 0.0
    %v2601 = vmax.f32 %v2594, 0.0
    %v2602 = vpack.c.bf16 %v2598, %v2598
    %v2603 = vpack.c.bf16 %v2599, %v2599
    %v2604 = vpack.c.bf16 %v2600, %v2600
    %v2605 = vpack.c.bf16 %v2601, %v2601
    %v2606 = vld [vmem:[#allocation10] sm:$0xf]
    %v2607 = vld [vmem:[#allocation10 + $0x4] sm:$0xf]
    %v2608 = vld [vmem:[#allocation10 + $0x8] sm:$0xf]
    %v2609 = vld [vmem:[#allocation10 + $0xc] sm:$0xf]
    %v2610 = vld [vmem:[#allocation10 + $0x10] sm:$0xf]
    %v2611 = vld [vmem:[#allocation10 + $0x14] sm:$0xf]
    %v2612 = vld [vmem:[#allocation10 + $0x18] sm:$0xf]
    %v2613 = vld [vmem:[#allocation10 + $0x1c] sm:$0xf]
    %v2614 = vld [vmem:[#allocation10 + $0x20] sm:$0xf]
    %v2615 = vld [vmem:[#allocation10 + $0x24] sm:$0xf]
    %v2616 = vld [vmem:[#allocation10 + $0x28] sm:$0xf]
    %v2617 = vld [vmem:[#allocation10 + $0x2c] sm:$0xf]
    %v2618 = vld [vmem:[#allocation10 + $0x30] sm:$0xf]
    %v2619 = vld [vmem:[#allocation10 + $0x34] sm:$0xf]
    %v2620 = vld [vmem:[#allocation10 + $0x38] sm:$0xf]
    %v2621 = vld [vmem:[#allocation10 + $0x3c] sm:$0xf]
    %v2622 = vld [vmem:[#allocation10 + $0x40] sm:$0xf]
    %v2623 = vld [vmem:[#allocation10 + $0x44] sm:$0xf]
    %v2624 = vld [vmem:[#allocation10 + $0x48] sm:$0xf]
    %v2625 = vld [vmem:[#allocation10 + $0x4c] sm:$0xf]
    %v2626 = vld [vmem:[#allocation10 + $0x50] sm:$0xf]
    %v2627 = vld [vmem:[#allocation10 + $0x54] sm:$0xf]
    %v2628 = vld [vmem:[#allocation10 + $0x58] sm:$0xf]
    %v2629 = vld [vmem:[#allocation10 + $0x5c] sm:$0xf]
    %v2630 = vld [vmem:[#allocation10 + $0x60] sm:$0xf]
    %v2631 = vld [vmem:[#allocation10 + $0x64] sm:$0xf]
    %v2632 = vld [vmem:[#allocation10 + $0x68] sm:$0xf]
    %v2633 = vld [vmem:[#allocation10 + $0x6c] sm:$0xf]
    %v2634 = vld [vmem:[#allocation10 + $0x70] sm:$0xf]
    %v2635 = vld [vmem:[#allocation10 + $0x74] sm:$0xf]
    %v2636 = vld [vmem:[#allocation10 + $0x78] sm:$0xf]
    %v2637 = vld [vmem:[#allocation10 + $0x7c] sm:$0xf]
    %v2638 = vld [vmem:[#allocation10 + $0x80] sm:$0xf]
    %v2639 = vld [vmem:[#allocation10 + $0x84] sm:$0xf]
    %v2640 = vld [vmem:[#allocation10 + $0x88] sm:$0xf]
    %v2641 = vld [vmem:[#allocation10 + $0x8c] sm:$0xf]
    %v2642 = vld [vmem:[#allocation10 + $0x90] sm:$0xf]
    %v2643 = vld [vmem:[#allocation10 + $0x94] sm:$0xf]
    %v2644 = vld [vmem:[#allocation10 + $0x98] sm:$0xf]
    %v2645 = vld [vmem:[#allocation10 + $0x9c] sm:$0xf]
    %v2646 = vld [vmem:[#allocation10 + $0xa0] sm:$0xf]
    %v2647 = vld [vmem:[#allocation10 + $0xa4] sm:$0xf]
    %v2648 = vld [vmem:[#allocation10 + $0xa8] sm:$0xf]
    %v2649 = vld [vmem:[#allocation10 + $0xac] sm:$0xf]
    %v2650 = vld [vmem:[#allocation10 + $0xb0] sm:$0xf]
    %v2651 = vld [vmem:[#allocation10 + $0xb4] sm:$0xf]
    %v2652 = vld [vmem:[#allocation10 + $0xb8] sm:$0xf]
    %v2653 = vld [vmem:[#allocation10 + $0xbc] sm:$0xf]
    %v2654 = vld [vmem:[#allocation10 + $0xc0] sm:$0xf]
    %v2655 = vld [vmem:[#allocation10 + $0xc4] sm:$0xf]
    %v2656 = vld [vmem:[#allocation10 + $0xc8] sm:$0xf]
    %v2657 = vld [vmem:[#allocation10 + $0xcc] sm:$0xf]
    %v2658 = vld [vmem:[#allocation10 + $0xd0] sm:$0xf]
    %v2659 = vld [vmem:[#allocation10 + $0xd4] sm:$0xf]
    %v2660 = vld [vmem:[#allocation10 + $0xd8] sm:$0xf]
    %v2661 = vld [vmem:[#allocation10 + $0xdc] sm:$0xf]
    %v2662 = vld [vmem:[#allocation10 + $0xe0] sm:$0xf]
    %v2663 = vld [vmem:[#allocation10 + $0xe4] sm:$0xf]
    %v2664 = vld [vmem:[#allocation10 + $0xe8] sm:$0xf]
    %v2665 = vld [vmem:[#allocation10 + $0xec] sm:$0xf]
    %v2666 = vld [vmem:[#allocation10 + $0xf0] sm:$0xf]
    %v2667 = vld [vmem:[#allocation10 + $0xf4] sm:$0xf]
    %v2668 = vld [vmem:[#allocation10 + $0xf8] sm:$0xf]
    %v2669 = vld [vmem:[#allocation10 + $0xfc] sm:$0xf]
    %v2670 = vld [vmem:[%s6] sm:$0x1]
    %v2672 = vlaneseq
    %v2673 = vshrl.u32 %v2672, 7
    %v2674 = vsub.s32 0, %v2673
    %v2675 = vrot.slane %v2670, %v2674
    %v2741 = vunpack.c.l.b16 %v2606
    %v2742 = vunpack.c.l.b16 %v2607
    %v2743 = vunpack.c.l.b16 %v2608
    %v2744 = vunpack.c.l.b16 %v2609
    %v2745 = vunpack.c.l.b16 %v2610
    %v2746 = vunpack.c.l.b16 %v2611
    %v2747 = vunpack.c.l.b16 %v2612
    %v2748 = vunpack.c.l.b16 %v2613
    %v2749 = vunpack.c.l.b16 %v2614
    %v2750 = vunpack.c.l.b16 %v2615
    %v2751 = vunpack.c.l.b16 %v2616
    %v2752 = vunpack.c.l.b16 %v2617
    %v2753 = vunpack.c.l.b16 %v2618
    %v2754 = vunpack.c.l.b16 %v2619
    %v2755 = vunpack.c.l.b16 %v2620
    %v2756 = vunpack.c.l.b16 %v2621
    %v2757 = vunpack.c.l.b16 %v2622
    %v2758 = vunpack.c.l.b16 %v2623
    %v2759 = vunpack.c.l.b16 %v2624
    %v2760 = vunpack.c.l.b16 %v2625
    %v2761 = vunpack.c.l.b16 %v2626
    %v2762 = vunpack.c.l.b16 %v2627
    %v2763 = vunpack.c.l.b16 %v2628
    %v2764 = vunpack.c.l.b16 %v2629
    %v2765 = vunpack.c.l.b16 %v2630
    %v2766 = vunpack.c.l.b16 %v2631
    %v2767 = vunpack.c.l.b16 %v2632
    %v2768 = vunpack.c.l.b16 %v2633
    %v2769 = vunpack.c.l.b16 %v2634
    %v2770 = vunpack.c.l.b16 %v2635
    %v2771 = vunpack.c.l.b16 %v2636
    %v2772 = vunpack.c.l.b16 %v2637
    %v2773 = vunpack.c.l.b16 %v2638
    %v2774 = vunpack.c.l.b16 %v2639
    %v2775 = vunpack.c.l.b16 %v2640
    %v2776 = vunpack.c.l.b16 %v2641
    %v2777 = vunpack.c.l.b16 %v2642
    %v2778 = vunpack.c.l.b16 %v2643
    %v2779 = vunpack.c.l.b16 %v2644
    %v2780 = vunpack.c.l.b16 %v2645
    %v2781 = vunpack.c.l.b16 %v2646
    %v2782 = vunpack.c.l.b16 %v2647
    %v2783 = vunpack.c.l.b16 %v2648
    %v2784 = vunpack.c.l.b16 %v2649
    %v2785 = vunpack.c.l.b16 %v2650
    %v2786 = vunpack.c.l.b16 %v2651
    %v2787 = vunpack.c.l.b16 %v2652
    %v2788 = vunpack.c.l.b16 %v2653
    %v2789 = vunpack.c.l.b16 %v2654
    %v2790 = vunpack.c.l.b16 %v2655
    %v2791 = vunpack.c.l.b16 %v2656
    %v2792 = vunpack.c.l.b16 %v2657
    %v2793 = vunpack.c.l.b16 %v2658
    %v2794 = vunpack.c.l.b16 %v2659
    %v2795 = vunpack.c.l.b16 %v2660
    %v2796 = vunpack.c.l.b16 %v2661
    %v2797 = vunpack.c.l.b16 %v2662
    %v2798 = vunpack.c.l.b16 %v2663
    %v2799 = vunpack.c.l.b16 %v2664
    %v2800 = vunpack.c.l.b16 %v2665
    %v2801 = vunpack.c.l.b16 %v2666
    %v2802 = vunpack.c.l.b16 %v2667
    %v2803 = vunpack.c.l.b16 %v2668
    %v2804 = vunpack.c.l.b16 %v2669
    %v2805 = vpack.c.b16 %v2742, %v2741
    %v2806 = vpack.c.b16 %v2744, %v2743
    %v2807 = vpack.c.b16 %v2746, %v2745
    %v2808 = vpack.c.b16 %v2748, %v2747
    %v2809 = vpack.c.b16 %v2750, %v2749
    %v2810 = vpack.c.b16 %v2752, %v2751
    %v2811 = vpack.c.b16 %v2754, %v2753
    %v2812 = vpack.c.b16 %v2756, %v2755
    %v2813 = vpack.c.b16 %v2758, %v2757
    %v2814 = vpack.c.b16 %v2760, %v2759
    %v2815 = vpack.c.b16 %v2762, %v2761
    %v2816 = vpack.c.b16 %v2764, %v2763
    %v2817 = vpack.c.b16 %v2766, %v2765
    %v2818 = vpack.c.b16 %v2768, %v2767
    %v2819 = vpack.c.b16 %v2770, %v2769
    %v2820 = vpack.c.b16 %v2772, %v2771
    %v2821 = vpack.c.b16 %v2774, %v2773
    %v2822 = vpack.c.b16 %v2776, %v2775
    %v2823 = vpack.c.b16 %v2778, %v2777
    %v2824 = vpack.c.b16 %v2780, %v2779
    %v2825 = vpack.c.b16 %v2782, %v2781
    %v2826 = vpack.c.b16 %v2784, %v2783
    %v2827 = vpack.c.b16 %v2786, %v2785
    %v2828 = vpack.c.b16 %v2788, %v2787
    %v2829 = vpack.c.b16 %v2790, %v2789
    %v2830 = vpack.c.b16 %v2792, %v2791
    %v2831 = vpack.c.b16 %v2794, %v2793
    %v2832 = vpack.c.b16 %v2796, %v2795
    %v2833 = vpack.c.b16 %v2798, %v2797
    %v2834 = vpack.c.b16 %v2800, %v2799
    %v2835 = vpack.c.b16 %v2802, %v2801
    %v2836 = vpack.c.b16 %v2804, %v2803
    %2869 = vmatprep.subr.bf16.mxu0 0
    %2870 = vmatpush1.bf16.msra.mxu0 %v2812
    %2871 = vmatprep.subr.bf16.mxu0 0
    %2872 = vmatpush1.bf16.msra.mxu0 %v2811
    %2873 = vmatprep.subr.bf16.mxu0 0
    %2874 = vmatpush1.bf16.msra.mxu0 %v2810
    %2875 = vmatprep.subr.bf16.mxu0 0
    %2876 = vmatpush1.bf16.msra.mxu0 %v2809
    %2877 = vmatprep.subr.bf16.mxu0 0
    %2878 = vmatpush1.bf16.msra.mxu0 %v2808
    %2879 = vmatprep.subr.bf16.mxu0 0
    %2880 = vmatpush1.bf16.msra.mxu0 %v2807
    %2881 = vmatprep.subr.bf16.mxu0 0
    %2882 = vmatpush1.bf16.msra.mxu0 %v2806
    %2883 = vmatprep.subr.bf16.mxu0 0
    %2884 = vmatpush1.bf16.msra.mxu0 %v2805
    %2885 = vmatprep.subr.bf16.mxu0 0
    %2886 = vmatpush2.bf16.msra.mxu0 %v2820
    %2887 = vmatprep.subr.bf16.mxu0 0
    %2888 = vmatpush2.bf16.msra.mxu0 %v2819
    %2889 = vmatprep.subr.bf16.mxu0 0
    %2890 = vmatpush2.bf16.msra.mxu0 %v2818
    %2891 = vmatprep.subr.bf16.mxu0 0
    %2892 = vmatpush2.bf16.msra.mxu0 %v2817
    %2893 = vmatprep.subr.bf16.mxu0 0
    %2894 = vmatpush2.bf16.msra.mxu0 %v2816
    %2895 = vmatprep.subr.bf16.mxu0 0
    %2896 = vmatpush2.bf16.msra.mxu0 %v2815
    %2897 = vmatprep.subr.bf16.mxu0 0
    %2898 = vmatpush2.bf16.msra.mxu0 %v2814
    %2899 = vmatprep.subr.bf16.mxu0 0
    %2900 = vmatpush2.bf16.msra.mxu0 %v2813
    %2901 = vmatprep.mubr.bf16.mxu0 %v2603
    %2902 = vmatmul.mubr.bf16.gmra.mxu0 %v2602
    %v2903 = vpop.f32.mrf.mxu0
    %v2904 = vadd.f32 %v2675, %v2903
    %v2905 = vpop.f32.mrf.mxu0
    %v2906 = vpop.f32.mrf.mxu0
    %v2907 = vpop.f32.mrf.mxu0
    %2908 = vdwg.mxu0
    %2909 = vmatprep.subr.bf16.mxu0 0
    %2910 = vmatpush1.bf16.msra.mxu0 %v2828
    %2911 = vmatprep.subr.bf16.mxu0 0
    %2912 = vmatpush1.bf16.msra.mxu0 %v2827
    %2913 = vmatprep.subr.bf16.mxu0 0
    %2914 = vmatpush1.bf16.msra.mxu0 %v2826
    %2915 = vmatprep.subr.bf16.mxu0 0
    %2916 = vmatpush1.bf16.msra.mxu0 %v2825
    %2917 = vmatprep.subr.bf16.mxu0 0
    %2918 = vmatpush1.bf16.msra.mxu0 %v2824
    %2919 = vmatprep.subr.bf16.mxu0 0
    %2920 = vmatpush1.bf16.msra.mxu0 %v2823
    %2921 = vmatprep.subr.bf16.mxu0 0
    %2922 = vmatpush1.bf16.msra.mxu0 %v2822
    %2923 = vmatprep.subr.bf16.mxu0 0
    %2924 = vmatpush1.bf16.msra.mxu0 %v2821
    %2925 = vmatprep.subr.bf16.mxu0 0
    %2926 = vmatpush2.bf16.msra.mxu0 %v2836
    %2927 = vmatprep.subr.bf16.mxu0 0
    %2928 = vmatpush2.bf16.msra.mxu0 %v2835
    %2929 = vmatprep.subr.bf16.mxu0 0
    %2930 = vmatpush2.bf16.msra.mxu0 %v2834
    %2931 = vmatprep.subr.bf16.mxu0 0
    %2932 = vmatpush2.bf16.msra.mxu0 %v2833
    %2933 = vmatprep.subr.bf16.mxu0 0
    %2934 = vmatpush2.bf16.msra.mxu0 %v2832
    %2935 = vmatprep.subr.bf16.mxu0 0
    %2936 = vmatpush2.bf16.msra.mxu0 %v2831
    %2937 = vmatprep.subr.bf16.mxu0 0
    %2938 = vmatpush2.bf16.msra.mxu0 %v2830
    %2939 = vmatprep.subr.bf16.mxu0 0
    %2940 = vmatpush2.bf16.msra.mxu0 %v2829
    %2941 = vmatprep.mubr.bf16.mxu0 %v2605
    %2942 = vmatmul.mubr.bf16.gmra.mxu0 %v2604
    %v2943 = vpop.f32.mrf.mxu0
    %v2944 = vadd.f32 %v2904, %v2943
    %v2945 = vpop.f32.mrf.mxu0
    %v2946 = vpop.f32.mrf.mxu0
    %v2947 = vpop.f32.mrf.mxu0
    %2948 = vdwg.mxu0
    %2949 = vst [vmem:[#allocation11] sm:$0xff] %v2944
    // Predicated region
    $region50: #{tpu_custom_call.1} parent=1 // pred_check
      _
    $region51: #{tpu_custom_call.1} parent=1 // pred_check_branch
      %2951 = sbr.rel (0) target = $region53
    $region52: #{tpu_custom_call.1} parent=1 // pred_region
      %s2953 = ssub.s32 128, 128
      %2954 = vsyncadd [#allocation4], %s2953
      %s2956 = sshll.u32 [#allocation11], 4
      %s2957 = int_to_ptr.vmem [resolvable:$true] %s2956
      %2959 = dma.vmem_to_hbm [thread:$0]  %s2957, 128, %s7, [#allocation4]
    $region53: #{tpu_custom_call.1} parent=1 // pred_fallthru
      _
    // Predicated region
    $region54: #{tpu_custom_call.1} parent=1 // pred_check
      _
    $region55: #{tpu_custom_call.1} parent=1 // pred_check_branch
      %2961 = sbr.rel (0) target = $region57
    $region56: #{tpu_custom_call.1} parent=1 // pred_region
      %2962 = dma.done [#allocation4], 128
    $region57: #{tpu_custom_call.1} parent=1 // pred_fallthru
      _
    %2963 = vsyncpa [#allocation3], 1
    %2964 = vsyncpa [#allocation6], 1
    %2965 = vsyncpa [#allocation9], 1
    %2966 = vsyncpa [#allocation4], 1

</llo_original>
